<compile_context>
chip_gen: v6e
topology: v6e:2x2x1
jax: 0.10.0
libtpu: 0.0.40
codegen_flags: <defaults>
</compile_context>

<pallas_src>
import functools

import jax
import jax.numpy as jnp
from jax import lax
from jax.experimental import pallas as pl
from jax.experimental.pallas import tpu as pltpu


# ---------------------------------------------------------------------------
# Fused kernel: one grid step == Nb batch elements, everything stays in VMEM.
# ---------------------------------------------------------------------------
def _block_kernel(*refs, K, stride, H, W, Nb, shortcut):
    it = iter(refs)
    x_ref = next(it)        # (Nb, Cin, H*W)   channel-major input
    m_ref = next(it)        # (K*K, 1, H*W)    border-validity masks (0/1)
    w1_ref = next(it)       # (Cexp, Cin)      expand 1x1 (BN scale folded)
    b1_ref = next(it)       # (Cexp, 1)
    w2_ref = next(it)       # (K*K, Cexp, 1)   depthwise taps (BN scale folded)
    b2_ref = next(it)       # (Cexp, 1)
    w3_ref = next(it)       # (Cout, Cexp)     pointwise 1x1 (BN scale folded)
    b3_ref = next(it)       # (Cout, 1)
    wsc_ref = bsc_ref = sel_ref = None
    if shortcut == "conv":
        wsc_ref = next(it)  # (Cout, Cin)
        bsc_ref = next(it)  # (Cout, 1)
    if stride > 1:
        sel_ref = next(it)  # (H*W, Ho*Wo)     0/1 stride-subsampling matrix
    o_ref = next(it)        # (Nb, Cout, Ho*Wo)

    HW = H * W
    pad = K // 2

    # Hoisted once per grid step, reused across the Nb images.
    w1 = w1_ref[...]
    b1 = b1_ref[...]
    b2 = b2_ref[...]
    w3 = w3_ref[...]
    b3 = b3_ref[...]
    w_taps = [w2_ref[t] for t in range(K * K)]      # (Cexp, 1) each
    m_taps = [m_ref[t] for t in range(K * K)]       # (1, HW) each
    if shortcut == "conv":
        wsc = wsc_ref[...]
        bsc = bsc_ref[...]
    if stride > 1:
        sel = sel_ref[...]

    for nb in range(Nb):                            # static unroll over images
        x = x_ref[nb]                               # (Cin, HW), lane-dense

        # ---- stage 1: expand 1x1 conv + BN shift + ReLU (channel-major) ----
        y1 = jnp.dot(w1, x, preferred_element_type=jnp.float32)   # (Cexp, HW)
        y1 = jnp.maximum(y1 + b1, 0.0)

        # ---- stage 2: depthwise KxK via XLU lane rolls + border masks ------
        acc = None
        for kh in range(K):
            for kw in range(K):
                t = kh * K + kw
                s = (kh - pad) * W + (kw - pad)
                if s == 0:                          # center tap: no roll/mask
                    contrib = y1 * w_taps[t]
                else:
                    shifted = pltpu.roll(y1, shift=(-s) % HW, axis=1)
                    contrib = (shifted * m_taps[t]) * w_taps[t]
                # BN shift folded into the accumulator init (first tap).
                acc = contrib + b2 if acc is None else acc + contrib
        y2 = jnp.maximum(acc, 0.0)                  # (Cexp, HW), f32

        if stride > 1:
            # Subsample flattened spatial lanes with a tiny selection matmul.
            y2 = jnp.dot(y2, sel, preferred_element_type=jnp.float32)

        # ---- stage 3 (+ shortcut), already in (Cout, spatial) layout --------
        y3 = jnp.dot(w3, y2.astype(w3.dtype),
                     preferred_element_type=jnp.float32) + b3
        if shortcut == "identity":
            y3 = y3 + x.astype(jnp.float32)         # plain add, no eye() matmul
        elif shortcut == "conv":
            y3 = y3 + (jnp.dot(wsc, x, preferred_element_type=jnp.float32) + bsc)

        o_ref[nb] = y3.astype(o_ref.dtype)          # lane-dense store


# ---------------------------------------------------------------------------
# Wrapper: folds BN, builds specs/masks, calls the fused kernel once.
# ---------------------------------------------------------------------------
def _fold_bn(gamma, beta, mean, var, eps=1e-5):
    scale = gamma / jnp.sqrt(var + eps)
    shift = beta - mean * scale
    return scale, shift


def block_forward(x_nchw, params, *, kernel_size, stride, batch_tile=None,
                  compute_dtype=jnp.float32):
    N, Cin, H, W = x_nchw.shape
    K = kernel_size
    pad = K // 2
    Ho = (H + 2 * pad - K) // stride + 1
    Wo = (W + 2 * pad - K) // stride + 1
    HW, HWo = H * W, Ho * Wo
    Cexp = params["w1"].shape[1]
    Cout = params["w3"].shape[1]

    residual = (stride == 1)
    if residual:
        shortcut = "conv" if "w_sc" in params else "identity"
        if shortcut == "identity":
            assert Cin == Cout, "identity shortcut requires in_size == out_size"
    else:
        shortcut = "none"

    if batch_tile is None:
        batch_tile = next(nb for nb in (4, 2, 1) if N % nb == 0)
    assert N % batch_tile == 0
    Nb = batch_tile

    # Channel-major: NCHW consumed directly as (N, Cin, H*W) -- free reshape,
    # no HBM transpose.
    x = x_nchw.reshape(N, Cin, HW).astype(compute_dtype)

    s1, b1 = _fold_bn(*params["bn1"])
    s2, b2 = _fold_bn(*params["bn2"])
    s3, b3 = _fold_bn(*params["bn3"])
    w1cm = (params["w1"] * s1[None, :]).T.astype(compute_dtype)        # (Cexp, Cin)
    w2t = (params["w2"] * s2[None, :]).astype(jnp.float32)[:, :, None]  # (K*K,Cexp,1)
    w3cm = (params["w3"] * s3[None, :]).T.astype(compute_dtype)        # (Cout, Cexp)
    b1c = b1[:, None].astype(jnp.float32)
    b2c = b2[:, None].astype(jnp.float32)
    b3c = b3[:, None].astype(jnp.float32)

    # Border-validity masks for the K*K depthwise taps (trace-time, tiny).
    ii = jnp.arange(HW, dtype=jnp.int32) // W
    jj = jnp.arange(HW, dtype=jnp.int32) % W
    mask_rows = []
    for kh in range(K):
        for kw in range(K):
            dh, dw = kh - pad, kw - pad
            ok = ((ii + dh >= 0) & (ii + dh < H) &
                  (jj + dw >= 0) & (jj + dw < W))
            mask_rows.append(ok.astype(jnp.float32))
    masks = jnp.stack(mask_rows, axis=0)[:, None, :]                   # (K*K,1,HW)

    args = [x, masks, w1cm, b1c, w2t, b2c, w3cm, b3c]
    in_specs = [
        pl.BlockSpec((Nb, Cin, HW), lambda n: (n, 0, 0)),
        pl.BlockSpec((K * K, 1, HW), lambda n: (0, 0, 0)),
        pl.BlockSpec((Cexp, Cin), lambda n: (0, 0)),
        pl.BlockSpec((Cexp, 1), lambda n: (0, 0)),
        pl.BlockSpec((K * K, Cexp, 1), lambda n: (0, 0, 0)),
        pl.BlockSpec((Cexp, 1), lambda n: (0, 0)),
        pl.BlockSpec((Cout, Cexp), lambda n: (0, 0)),
        pl.BlockSpec((Cout, 1), lambda n: (0, 0)),
    ]
    if shortcut == "conv":
        ss, bs = _fold_bn(*params["bn_sc"])
        wscm = (params["w_sc"] * ss[None, :]).T.astype(compute_dtype)  # (Cout, Cin)
        bscc = bs[:, None].astype(jnp.float32)
        args += [wscm, bscc]
        in_specs += [pl.BlockSpec((Cout, Cin), lambda n: (0, 0)),
                     pl.BlockSpec((Cout, 1), lambda n: (0, 0))]
    if stride > 1:
        src = (jnp.arange(Ho)[:, None] * stride * W
               + jnp.arange(Wo)[None, :] * stride).reshape(-1)
        sel = jnp.zeros((HW, HWo), jnp.float32).at[src, jnp.arange(HWo)].set(1.0)
        args += [sel]
        in_specs += [pl.BlockSpec((HW, HWo), lambda n: (0, 0))]

    flops = (2 * N * HW * Cin * Cexp
             + 2 * N * HW * K * K * Cexp
             + 2 * N * HWo * Cexp * Cout
             + (2 * N * HW * Cin * Cout if shortcut == "conv" else 0)
             + (2 * N * HW * HWo * Cexp if stride > 1 else 0))
    bytes_accessed = (sum(int(a.size) * a.dtype.itemsize for a in args)
                      + 4 * N * Cout * HWo)

    out = pl.pallas_call(
        functools.partial(_block_kernel, K=K, stride=stride, H=H, W=W,
                          Nb=Nb, shortcut=shortcut),
        out_shape=jax.ShapeDtypeStruct((N, Cout, HWo), jnp.float32),
        grid=(N // Nb,),
        in_specs=in_specs,
        out_specs=pl.BlockSpec((Nb, Cout, HWo), lambda n: (n, 0, 0)),
        compiler_params=pltpu.CompilerParams(
            dimension_semantics=("parallel",),
            vmem_limit_bytes=32 * 1024 * 1024),
        cost_estimate=pl.CostEstimate(flops=int(flops), transcendentals=0,
                                      bytes_accessed=int(bytes_accessed)),
    )(*args)

    return out.reshape(N, Cout, Ho, Wo)     # already channel-major: free reshape


# ---------------------------------------------------------------------------
# Pure-JAX reference (unfolded eval-mode BN, XLA depthwise conv) for checking.
# ---------------------------------------------------------------------------
def ref_forward(x_nchw, params, *, kernel_size, stride, eps=1e-5):
    def bn(y, p):
        gamma, beta, mean, var = p
        return (y - mean) / jnp.sqrt(var + eps) * gamma + beta

    K, pad = kernel_size, kernel_size // 2
    x = jnp.transpose(x_nchw, (0, 2, 3, 1)).astype(jnp.float32)
    Cexp = params["w1"].shape[1]

    y = jnp.maximum(bn(jnp.einsum("nhwc,cd->nhwd", x, params["w1"]),
                       params["bn1"]), 0.0)
    w2 = params["w2"].reshape(K, K, 1, Cexp)
    y = lax.conv_general_dilated(
        y, w2, window_strides=(stride, stride),
        padding=[(pad, pad), (pad, pad)],
        dimension_numbers=("NHWC", "HWIO", "NHWC"),
        feature_group_count=Cexp)
    y = jnp.maximum(bn(y, params["bn2"]), 0.0)
    y = bn(jnp.einsum("nhwc,cd->nhwd", y, params["w3"]), params["bn3"])
    if stride == 1:
        if "w_sc" in params:
            sc = bn(jnp.einsum("nhwc,cd->nhwd", x, params["w_sc"]),
                    params["bn_sc"])
        else:
            sc = x
        y = y + sc
    return jnp.transpose(y, (0, 3, 1, 2))


# ---------------------------------------------------------------------------
if __name__ == "__main__":
    N, H, W = 2, 16, 16
    key = jax.random.PRNGKey(0)
    ks = jax.random.split(key, 24)

    def bn_params(kk, c):
        k1, k2, k3, k4 = jax.random.split(kk, 4)
        gamma = 1.0 + 0.1 * jax.random.normal(k1, (c,), jnp.float32)
        beta = 0.1 * jax.random.normal(k2, (c,), jnp.float32)
        mean = 0.1 * jax.random.normal(k3, (c,), jnp.float32)
        var = jnp.abs(1.0 + 0.1 * jax.random.normal(k4, (c,), jnp.float32))
        return gamma, beta, mean, var

    def make_params(keys, in_size, expand_size, out_size, kernel_size, with_sc):
        p = {
            "w1": 0.2 * jax.random.normal(keys[0], (in_size, expand_size), jnp.float32),
            "bn1": bn_params(keys[1], expand_size),
            "w2": 0.2 * jax.random.normal(keys[2], (kernel_size * kernel_size,
                                                    expand_size), jnp.float32),
            "bn2": bn_params(keys[3], expand_size),
            "w3": 0.2 * jax.random.normal(keys[4], (expand_size, out_size), jnp.float32),
            "bn3": bn_params(keys[5], out_size),
        }
        if with_sc:
            p["w_sc"] = 0.2 * jax.random.normal(keys[6], (in_size, out_size), jnp.float32)
            p["bn_sc"] = bn_params(keys[7], out_size)
        return p

    def check(name, x, params, kernel_size, stride):
        out = jax.block_until_ready(
            block_forward(x, params, kernel_size=kernel_size, stride=stride))
        ref = jax.block_until_ready(
            ref_forward(x, params, kernel_size=kernel_size, stride=stride))
        assert out.shape == ref.shape, (name, out.shape, ref.shape)
        err = float(jnp.max(jnp.abs(out - ref)))
        assert jnp.allclose(out, ref, atol=1e-4, rtol=1e-4), (name, err)

    # Block(kernel_size=3, in_size=4, expand_size=16, out_size=8,
    #       nolinear=ReLU, semodule=None, stride=1): conv+BN shortcut.
    params1 = make_params(ks[0:8], 4, 16, 8, 3, with_sc=True)
    x1 = jax.random.normal(ks[16], (N, 4, H, W), jnp.float32)   # NCHW input
    check("stride1_conv_shortcut", x1, params1, 3, 1)

    # Same weights with stride=2: no shortcut branch.
    check("stride2_no_shortcut", x1, params1, 3, 2)

    # in_size == out_size, stride=1: identity shortcut (plain add).
    params2 = make_params(ks[8:16], 8, 16, 8, 3, with_sc=False)
    x2 = jax.random.normal(ks[17], (N, 8, H, W), jnp.float32)
    check("stride1_identity_shortcut", x2, params2, 3, 1)

    print("KERNEL_OK")
</pallas_src>

<mosaic_0001>
module attributes {stable_mosaic.version = 11 : i64} {
  func.func @_block_kernel(%arg0: i32, %arg1: memref<2x4x256xf32, #tpu.memory_space<vmem>>, %arg2: memref<9x1x256xf32, #tpu.memory_space<vmem>>, %arg3: memref<16x4xf32, #tpu.memory_space<vmem>>, %arg4: memref<16x1xf32, #tpu.memory_space<vmem>>, %arg5: memref<9x16x1xf32, #tpu.memory_space<vmem>>, %arg6: memref<16x1xf32, #tpu.memory_space<vmem>>, %arg7: memref<8x16xf32, #tpu.memory_space<vmem>>, %arg8: memref<8x1xf32, #tpu.memory_space<vmem>>, %arg9: memref<8x4xf32, #tpu.memory_space<vmem>>, %arg10: memref<8x1xf32, #tpu.memory_space<vmem>>, %arg11: memref<2x8x256xf32, #tpu.memory_space<vmem>>) attributes {dimension_semantics = [#tpu.dimension_semantics<parallel>], iteration_bounds = array<i64: 1>, scalar_prefetch = 0 : i64, scratch_operands = 0 : i64, tpu.core_type = #tpu.core_type<tc>, window_params = [{transform_indices = @transform_0, window_bounds = array<i64: 2, 4, 256>}, {pipeline_mode = #tpu.pipeline_mode<synchronous>, transform_indices = @transform_1, window_bounds = array<i64: 9, 1, 256>}, {pipeline_mode = #tpu.pipeline_mode<synchronous>, transform_indices = @transform_2, window_bounds = array<i64: 16, 4>}, {pipeline_mode = #tpu.pipeline_mode<synchronous>, transform_indices = @transform_3, window_bounds = array<i64: 16, 1>}, {pipeline_mode = #tpu.pipeline_mode<synchronous>, transform_indices = @transform_4, window_bounds = array<i64: 9, 16, 1>}, {pipeline_mode = #tpu.pipeline_mode<synchronous>, transform_indices = @transform_5, window_bounds = array<i64: 16, 1>}, {pipeline_mode = #tpu.pipeline_mode<synchronous>, transform_indices = @transform_6, window_bounds = array<i64: 8, 16>}, {pipeline_mode = #tpu.pipeline_mode<synchronous>, transform_indices = @transform_7, window_bounds = array<i64: 8, 1>}, {pipeline_mode = #tpu.pipeline_mode<synchronous>, transform_indices = @transform_8, window_bounds = array<i64: 8, 4>}, {pipeline_mode = #tpu.pipeline_mode<synchronous>, transform_indices = @transform_9, window_bounds = array<i64: 8, 1>}, {transform_indices = @transform_10, window_bounds = array<i64: 2, 8, 256>}]} {
    %c0 = arith.constant 0 : index
    %c0_0 = arith.constant 0 : index
    %0 = vector.load %arg3[%c0, %c0_0] : memref<16x4xf32, #tpu.memory_space<vmem>>, vector<16x4xf32>
    %c0_1 = arith.constant 0 : index
    %c0_2 = arith.constant 0 : index
    %1 = vector.load %arg4[%c0_1, %c0_2] : memref<16x1xf32, #tpu.memory_space<vmem>>, vector<16x1xf32>
    %c0_3 = arith.constant 0 : index
    %c0_4 = arith.constant 0 : index
    %2 = vector.load %arg6[%c0_3, %c0_4] : memref<16x1xf32, #tpu.memory_space<vmem>>, vector<16x1xf32>
    %c0_5 = arith.constant 0 : index
    %c0_6 = arith.constant 0 : index
    %3 = vector.load %arg7[%c0_5, %c0_6] : memref<8x16xf32, #tpu.memory_space<vmem>>, vector<8x16xf32>
    %c0_7 = arith.constant 0 : index
    %c0_8 = arith.constant 0 : index
    %4 = vector.load %arg8[%c0_7, %c0_8] : memref<8x1xf32, #tpu.memory_space<vmem>>, vector<8x1xf32>
    %c0_9 = arith.constant 0 : index
    %c0_10 = arith.constant 0 : index
    %c0_11 = arith.constant 0 : index
    %5 = vector.load %arg5[%c0_9, %c0_10, %c0_11] : memref<9x16x1xf32, #tpu.memory_space<vmem>>, vector<1x16x1xf32>
    %6 = vector.shape_cast %5 : vector<1x16x1xf32> to vector<16x1xf32>
    %c1 = arith.constant 1 : index
    %c0_12 = arith.constant 0 : index
    %c0_13 = arith.constant 0 : index
    %7 = vector.load %arg5[%c1, %c0_12, %c0_13] : memref<9x16x1xf32, #tpu.memory_space<vmem>>, vector<1x16x1xf32>
    %8 = vector.shape_cast %7 : vector<1x16x1xf32> to vector<16x1xf32>
    %c2 = arith.constant 2 : index
    %c0_14 = arith.constant 0 : index
    %c0_15 = arith.constant 0 : index
    %9 = vector.load %arg5[%c2, %c0_14, %c0_15] : memref<9x16x1xf32, #tpu.memory_space<vmem>>, vector<1x16x1xf32>
    %10 = vector.shape_cast %9 : vector<1x16x1xf32> to vector<16x1xf32>
    %c3 = arith.constant 3 : index
    %c0_16 = arith.constant 0 : index
    %c0_17 = arith.constant 0 : index
    %11 = vector.load %arg5[%c3, %c0_16, %c0_17] : memref<9x16x1xf32, #tpu.memory_space<vmem>>, vector<1x16x1xf32>
    %12 = vector.shape_cast %11 : vector<1x16x1xf32> to vector<16x1xf32>
    %c4 = arith.constant 4 : index
    %c0_18 = arith.constant 0 : index
    %c0_19 = arith.constant 0 : index
    %13 = vector.load %arg5[%c4, %c0_18, %c0_19] : memref<9x16x1xf32, #tpu.memory_space<vmem>>, vector<1x16x1xf32>
    %14 = vector.shape_cast %13 : vector<1x16x1xf32> to vector<16x1xf32>
    %c5 = arith.constant 5 : index
    %c0_20 = arith.constant 0 : index
    %c0_21 = arith.constant 0 : index
    %15 = vector.load %arg5[%c5, %c0_20, %c0_21] : memref<9x16x1xf32, #tpu.memory_space<vmem>>, vector<1x16x1xf32>
    %16 = vector.shape_cast %15 : vector<1x16x1xf32> to vector<16x1xf32>
    %c6 = arith.constant 6 : index
    %c0_22 = arith.constant 0 : index
    %c0_23 = arith.constant 0 : index
    %17 = vector.load %arg5[%c6, %c0_22, %c0_23] : memref<9x16x1xf32, #tpu.memory_space<vmem>>, vector<1x16x1xf32>
    %18 = vector.shape_cast %17 : vector<1x16x1xf32> to vector<16x1xf32>
    %c7 = arith.constant 7 : index
    %c0_24 = arith.constant 0 : index
    %c0_25 = arith.constant 0 : index
    %19 = vector.load %arg5[%c7, %c0_24, %c0_25] : memref<9x16x1xf32, #tpu.memory_space<vmem>>, vector<1x16x1xf32>
    %20 = vector.shape_cast %19 : vector<1x16x1xf32> to vector<16x1xf32>
    %c8 = arith.constant 8 : index
    %c0_26 = arith.constant 0 : index
    %c0_27 = arith.constant 0 : index
    %21 = vector.load %arg5[%c8, %c0_26, %c0_27] : memref<9x16x1xf32, #tpu.memory_space<vmem>>, vector<1x16x1xf32>
    %22 = vector.shape_cast %21 : vector<1x16x1xf32> to vector<16x1xf32>
    %c0_28 = arith.constant 0 : index
    %c0_29 = arith.constant 0 : index
    %c0_30 = arith.constant 0 : index
    %23 = vector.load %arg2[%c0_28, %c0_29, %c0_30] : memref<9x1x256xf32, #tpu.memory_space<vmem>>, vector<1x1x256xf32>
    %24 = vector.shape_cast %23 : vector<1x1x256xf32> to vector<1x256xf32>
    %c1_31 = arith.constant 1 : index
    %c0_32 = arith.constant 0 : index
    %c0_33 = arith.constant 0 : index
    %25 = vector.load %arg2[%c1_31, %c0_32, %c0_33] : memref<9x1x256xf32, #tpu.memory_space<vmem>>, vector<1x1x256xf32>
    %26 = vector.shape_cast %25 : vector<1x1x256xf32> to vector<1x256xf32>
    %c2_34 = arith.constant 2 : index
    %c0_35 = arith.constant 0 : index
    %c0_36 = arith.constant 0 : index
    %27 = vector.load %arg2[%c2_34, %c0_35, %c0_36] : memref<9x1x256xf32, #tpu.memory_space<vmem>>, vector<1x1x256xf32>
    %28 = vector.shape_cast %27 : vector<1x1x256xf32> to vector<1x256xf32>
    %c3_37 = arith.constant 3 : index
    %c0_38 = arith.constant 0 : index
    %c0_39 = arith.constant 0 : index
    %29 = vector.load %arg2[%c3_37, %c0_38, %c0_39] : memref<9x1x256xf32, #tpu.memory_space<vmem>>, vector<1x1x256xf32>
    %30 = vector.shape_cast %29 : vector<1x1x256xf32> to vector<1x256xf32>
    %c5_40 = arith.constant 5 : index
    %c0_41 = arith.constant 0 : index
    %c0_42 = arith.constant 0 : index
    %31 = vector.load %arg2[%c5_40, %c0_41, %c0_42] : memref<9x1x256xf32, #tpu.memory_space<vmem>>, vector<1x1x256xf32>
    %32 = vector.shape_cast %31 : vector<1x1x256xf32> to vector<1x256xf32>
    %c6_43 = arith.constant 6 : index
    %c0_44 = arith.constant 0 : index
    %c0_45 = arith.constant 0 : index
    %33 = vector.load %arg2[%c6_43, %c0_44, %c0_45] : memref<9x1x256xf32, #tpu.memory_space<vmem>>, vector<1x1x256xf32>
    %34 = vector.shape_cast %33 : vector<1x1x256xf32> to vector<1x256xf32>
    %c7_46 = arith.constant 7 : index
    %c0_47 = arith.constant 0 : index
    %c0_48 = arith.constant 0 : index
    %35 = vector.load %arg2[%c7_46, %c0_47, %c0_48] : memref<9x1x256xf32, #tpu.memory_space<vmem>>, vector<1x1x256xf32>
    %36 = vector.shape_cast %35 : vector<1x1x256xf32> to vector<1x256xf32>
    %c8_49 = arith.constant 8 : index
    %c0_50 = arith.constant 0 : index
    %c0_51 = arith.constant 0 : index
    %37 = vector.load %arg2[%c8_49, %c0_50, %c0_51] : memref<9x1x256xf32, #tpu.memory_space<vmem>>, vector<1x1x256xf32>
    %38 = vector.shape_cast %37 : vector<1x1x256xf32> to vector<1x256xf32>
    %c0_52 = arith.constant 0 : index
    %c0_53 = arith.constant 0 : index
    %39 = vector.load %arg9[%c0_52, %c0_53] : memref<8x4xf32, #tpu.memory_space<vmem>>, vector<8x4xf32>
    %c0_54 = arith.constant 0 : index
    %c0_55 = arith.constant 0 : index
    %40 = vector.load %arg10[%c0_54, %c0_55] : memref<8x1xf32, #tpu.memory_space<vmem>>, vector<8x1xf32>
    %c0_56 = arith.constant 0 : index
    %c0_57 = arith.constant 0 : index
    %c0_58 = arith.constant 0 : index
    %41 = vector.load %arg1[%c0_56, %c0_57, %c0_58] : memref<2x4x256xf32, #tpu.memory_space<vmem>>, vector<1x4x256xf32>
    %42 = vector.shape_cast %41 : vector<1x4x256xf32> to vector<4x256xf32>
    %cst = arith.constant dense<0.000000e+00> : vector<16x256xf32>
    %43 = tpu.matmul %0, %42, %cst {dimension_numbers = #tpu.dot_dimension_numbers<[1], [0], [0], [1], [0, 0, 1, 1], [], []>} : vector<16x4xf32>, vector<4x256xf32>, vector<16x256xf32> -> vector<16x256xf32>
    %44 = vector.broadcast %1 : vector<16x1xf32> to vector<16x256xf32>
    %45 = arith.addf %43, %44 : vector<16x256xf32>
    %cst_59 = arith.constant 0.000000e+00 : f32
    %46 = vector.broadcast %cst_59 : f32 to vector<16x256xf32>
    %47 = arith.maximumf %45, %46 : vector<16x256xf32>
    %c17_i32 = arith.constant 17 : i32
    %48 = tpu.dynamic_rotate %47 by %c17_i32 dim 1 : vector<16x256xf32>, i32 -> vector<16x256xf32>
    %49 = vector.broadcast %24 : vector<1x256xf32> to vector<16x256xf32>
    %50 = arith.mulf %48, %49 : vector<16x256xf32>
    %51 = vector.broadcast %6 : vector<16x1xf32> to vector<16x256xf32>
    %52 = arith.mulf %50, %51 : vector<16x256xf32>
    %53 = vector.broadcast %2 : vector<16x1xf32> to vector<16x256xf32>
    %54 = arith.addf %52, %53 : vector<16x256xf32>
    %c16_i32 = arith.constant 16 : i32
    %55 = tpu.dynamic_rotate %47 by %c16_i32 dim 1 : vector<16x256xf32>, i32 -> vector<16x256xf32>
    %56 = vector.broadcast %26 : vector<1x256xf32> to vector<16x256xf32>
    %57 = arith.mulf %55, %56 : vector<16x256xf32>
    %58 = vector.broadcast %8 : vector<16x1xf32> to vector<16x256xf32>
    %59 = arith.mulf %57, %58 : vector<16x256xf32>
    %60 = arith.addf %54, %59 : vector<16x256xf32>
    %c15_i32 = arith.constant 15 : i32
    %61 = tpu.dynamic_rotate %47 by %c15_i32 dim 1 : vector<16x256xf32>, i32 -> vector<16x256xf32>
    %62 = vector.broadcast %28 : vector<1x256xf32> to vector<16x256xf32>
    %63 = arith.mulf %61, %62 : vector<16x256xf32>
    %64 = vector.broadcast %10 : vector<16x1xf32> to vector<16x256xf32>
    %65 = arith.mulf %63, %64 : vector<16x256xf32>
    %66 = arith.addf %60, %65 : vector<16x256xf32>
    %c1_i32 = arith.constant 1 : i32
    %67 = tpu.dynamic_rotate %47 by %c1_i32 dim 1 : vector<16x256xf32>, i32 -> vector<16x256xf32>
    %68 = vector.broadcast %30 : vector<1x256xf32> to vector<16x256xf32>
    %69 = arith.mulf %67, %68 : vector<16x256xf32>
    %70 = vector.broadcast %12 : vector<16x1xf32> to vector<16x256xf32>
    %71 = arith.mulf %69, %70 : vector<16x256xf32>
    %72 = arith.addf %66, %71 : vector<16x256xf32>
    %73 = vector.broadcast %14 : vector<16x1xf32> to vector<16x256xf32>
    %74 = arith.mulf %47, %73 : vector<16x256xf32>
    %75 = arith.addf %72, %74 : vector<16x256xf32>
    %c255_i32 = arith.constant 255 : i32
    %76 = tpu.dynamic_rotate %47 by %c255_i32 dim 1 : vector<16x256xf32>, i32 -> vector<16x256xf32>
    %77 = vector.broadcast %32 : vector<1x256xf32> to vector<16x256xf32>
    %78 = arith.mulf %76, %77 : vector<16x256xf32>
    %79 = vector.broadcast %16 : vector<16x1xf32> to vector<16x256xf32>
    %80 = arith.mulf %78, %79 : vector<16x256xf32>
    %81 = arith.addf %75, %80 : vector<16x256xf32>
    %c241_i32 = arith.constant 241 : i32
    %82 = tpu.dynamic_rotate %47 by %c241_i32 dim 1 : vector<16x256xf32>, i32 -> vector<16x256xf32>
    %83 = vector.broadcast %34 : vector<1x256xf32> to vector<16x256xf32>
    %84 = arith.mulf %82, %83 : vector<16x256xf32>
    %85 = vector.broadcast %18 : vector<16x1xf32> to vector<16x256xf32>
    %86 = arith.mulf %84, %85 : vector<16x256xf32>
    %87 = arith.addf %81, %86 : vector<16x256xf32>
    %c240_i32 = arith.constant 240 : i32
    %88 = tpu.dynamic_rotate %47 by %c240_i32 dim 1 : vector<16x256xf32>, i32 -> vector<16x256xf32>
    %89 = vector.broadcast %36 : vector<1x256xf32> to vector<16x256xf32>
    %90 = arith.mulf %88, %89 : vector<16x256xf32>
    %91 = vector.broadcast %20 : vector<16x1xf32> to vector<16x256xf32>
    %92 = arith.mulf %90, %91 : vector<16x256xf32>
    %93 = arith.addf %87, %92 : vector<16x256xf32>
    %c239_i32 = arith.constant 239 : i32
    %94 = tpu.dynamic_rotate %47 by %c239_i32 dim 1 : vector<16x256xf32>, i32 -> vector<16x256xf32>
    %95 = vector.broadcast %38 : vector<1x256xf32> to vector<16x256xf32>
    %96 = arith.mulf %94, %95 : vector<16x256xf32>
    %97 = vector.broadcast %22 : vector<16x1xf32> to vector<16x256xf32>
    %98 = arith.mulf %96, %97 : vector<16x256xf32>
    %99 = arith.addf %93, %98 : vector<16x256xf32>
    %cst_60 = arith.constant 0.000000e+00 : f32
    %100 = vector.broadcast %cst_60 : f32 to vector<16x256xf32>
    %101 = arith.maximumf %99, %100 : vector<16x256xf32>
    %cst_61 = arith.constant dense<0.000000e+00> : vector<8x256xf32>
    %102 = tpu.matmul %3, %101, %cst_61 {dimension_numbers = #tpu.dot_dimension_numbers<[1], [0], [0], [1], [0, 0, 1, 1], [], []>} : vector<8x16xf32>, vector<16x256xf32>, vector<8x256xf32> -> vector<8x256xf32>
    %103 = vector.broadcast %4 : vector<8x1xf32> to vector<8x256xf32>
    %104 = arith.addf %102, %103 : vector<8x256xf32>
    %cst_62 = arith.constant dense<0.000000e+00> : vector<8x256xf32>
    %105 = tpu.matmul %39, %42, %cst_62 {dimension_numbers = #tpu.dot_dimension_numbers<[1], [0], [0], [1], [0, 0, 1, 1], [], []>} : vector<8x4xf32>, vector<4x256xf32>, vector<8x256xf32> -> vector<8x256xf32>
    %106 = vector.broadcast %40 : vector<8x1xf32> to vector<8x256xf32>
    %107 = arith.addf %105, %106 : vector<8x256xf32>
    %108 = arith.addf %104, %107 : vector<8x256xf32>
    %c0_63 = arith.constant 0 : index
    %c0_64 = arith.constant 0 : index
    %c0_65 = arith.constant 0 : index
    %109 = vector.load %arg11[%c0_63, %c0_64, %c0_65] : memref<2x8x256xf32, #tpu.memory_space<vmem>>, vector<1x8x256xf32>
    %110 = vector.shape_cast %109 : vector<1x8x256xf32> to vector<8x256xf32>
    %111 = vector.shape_cast %108 : vector<8x256xf32> to vector<1x8x256xf32>
    tpu.vector_store %arg11[%c0_63, %c0_64, %c0_65], %111 {strides = array<i32>} : memref<2x8x256xf32, #tpu.memory_space<vmem>>, vector<1x8x256xf32>,
    %c1_66 = arith.constant 1 : index
    %c0_67 = arith.constant 0 : index
    %c0_68 = arith.constant 0 : index
    %112 = vector.load %arg1[%c1_66, %c0_67, %c0_68] : memref<2x4x256xf32, #tpu.memory_space<vmem>>, vector<1x4x256xf32>
    %113 = vector.shape_cast %112 : vector<1x4x256xf32> to vector<4x256xf32>
    %cst_69 = arith.constant dense<0.000000e+00> : vector<16x256xf32>
    %114 = tpu.matmul %0, %113, %cst_69 {dimension_numbers = #tpu.dot_dimension_numbers<[1], [0], [0], [1], [0, 0, 1, 1], [], []>} : vector<16x4xf32>, vector<4x256xf32>, vector<16x256xf32> -> vector<16x256xf32>
    %115 = vector.broadcast %1 : vector<16x1xf32> to vector<16x256xf32>
    %116 = arith.addf %114, %115 : vector<16x256xf32>
    %cst_70 = arith.constant 0.000000e+00 : f32
    %117 = vector.broadcast %cst_70 : f32 to vector<16x256xf32>
    %118 = arith.maximumf %116, %117 : vector<16x256xf32>
    %c17_i32_71 = arith.constant 17 : i32
    %119 = tpu.dynamic_rotate %118 by %c17_i32_71 dim 1 : vector<16x256xf32>, i32 -> vector<16x256xf32>
    %120 = vector.broadcast %24 : vector<1x256xf32> to vector<16x256xf32>
    %121 = arith.mulf %119, %120 : vector<16x256xf32>
    %122 = vector.broadcast %6 : vector<16x1xf32> to vector<16x256xf32>
    %123 = arith.mulf %121, %122 : vector<16x256xf32>
    %124 = vector.broadcast %2 : vector<16x1xf32> to vector<16x256xf32>
    %125 = arith.addf %123, %124 : vector<16x256xf32>
    %c16_i32_72 = arith.constant 16 : i32
    %126 = tpu.dynamic_rotate %118 by %c16_i32_72 dim 1 : vector<16x256xf32>, i32 -> vector<16x256xf32>
    %127 = vector.broadcast %26 : vector<1x256xf32> to vector<16x256xf32>
    %128 = arith.mulf %126, %127 : vector<16x256xf32>
    %129 = vector.broadcast %8 : vector<16x1xf32> to vector<16x256xf32>
    %130 = arith.mulf %128, %129 : vector<16x256xf32>
    %131 = arith.addf %125, %130 : vector<16x256xf32>
    %c15_i32_73 = arith.constant 15 : i32
    %132 = tpu.dynamic_rotate %118 by %c15_i32_73 dim 1 : vector<16x256xf32>, i32 -> vector<16x256xf32>
    %133 = vector.broadcast %28 : vector<1x256xf32> to vector<16x256xf32>
    %134 = arith.mulf %132, %133 : vector<16x256xf32>
    %135 = vector.broadcast %10 : vector<16x1xf32> to vector<16x256xf32>
    %136 = arith.mulf %134, %135 : vector<16x256xf32>
    %137 = arith.addf %131, %136 : vector<16x256xf32>
    %c1_i32_74 = arith.constant 1 : i32
    %138 = tpu.dynamic_rotate %118 by %c1_i32_74 dim 1 : vector<16x256xf32>, i32 -> vector<16x256xf32>
    %139 = vector.broadcast %30 : vector<1x256xf32> to vector<16x256xf32>
    %140 = arith.mulf %138, %139 : vector<16x256xf32>
    %141 = vector.broadcast %12 : vector<16x1xf32> to vector<16x256xf32>
    %142 = arith.mulf %140, %141 : vector<16x256xf32>
    %143 = arith.addf %137, %142 : vector<16x256xf32>
    %144 = vector.broadcast %14 : vector<16x1xf32> to vector<16x256xf32>
    %145 = arith.mulf %118, %144 : vector<16x256xf32>
    %146 = arith.addf %143, %145 : vector<16x256xf32>
    %c255_i32_75 = arith.constant 255 : i32
    %147 = tpu.dynamic_rotate %118 by %c255_i32_75 dim 1 : vector<16x256xf32>, i32 -> vector<16x256xf32>
    %148 = vector.broadcast %32 : vector<1x256xf32> to vector<16x256xf32>
    %149 = arith.mulf %147, %148 : vector<16x256xf32>
    %150 = vector.broadcast %16 : vector<16x1xf32> to vector<16x256xf32>
    %151 = arith.mulf %149, %150 : vector<16x256xf32>
    %152 = arith.addf %146, %151 : vector<16x256xf32>
    %c241_i32_76 = arith.constant 241 : i32
    %153 = tpu.dynamic_rotate %118 by %c241_i32_76 dim 1 : vector<16x256xf32>, i32 -> vector<16x256xf32>
    %154 = vector.broadcast %34 : vector<1x256xf32> to vector<16x256xf32>
    %155 = arith.mulf %153, %154 : vector<16x256xf32>
    %156 = vector.broadcast %18 : vector<16x1xf32> to vector<16x256xf32>
    %157 = arith.mulf %155, %156 : vector<16x256xf32>
    %158 = arith.addf %152, %157 : vector<16x256xf32>
    %c240_i32_77 = arith.constant 240 : i32
    %159 = tpu.dynamic_rotate %118 by %c240_i32_77 dim 1 : vector<16x256xf32>, i32 -> vector<16x256xf32>
    %160 = vector.broadcast %36 : vector<1x256xf32> to vector<16x256xf32>
    %161 = arith.mulf %159, %160 : vector<16x256xf32>
    %162 = vector.broadcast %20 : vector<16x1xf32> to vector<16x256xf32>
    %163 = arith.mulf %161, %162 : vector<16x256xf32>
    %164 = arith.addf %158, %163 : vector<16x256xf32>
    %c239_i32_78 = arith.constant 239 : i32
    %165 = tpu.dynamic_rotate %118 by %c239_i32_78 dim 1 : vector<16x256xf32>, i32 -> vector<16x256xf32>
    %166 = vector.broadcast %38 : vector<1x256xf32> to vector<16x256xf32>
    %167 = arith.mulf %165, %166 : vector<16x256xf32>
    %168 = vector.broadcast %22 : vector<16x1xf32> to vector<16x256xf32>
    %169 = arith.mulf %167, %168 : vector<16x256xf32>
    %170 = arith.addf %164, %169 : vector<16x256xf32>
    %cst_79 = arith.constant 0.000000e+00 : f32
    %171 = vector.broadcast %cst_79 : f32 to vector<16x256xf32>
    %172 = arith.maximumf %170, %171 : vector<16x256xf32>
    %cst_80 = arith.constant dense<0.000000e+00> : vector<8x256xf32>
    %173 = tpu.matmul %3, %172, %cst_80 {dimension_numbers = #tpu.dot_dimension_numbers<[1], [0], [0], [1], [0, 0, 1, 1], [], []>} : vector<8x16xf32>, vector<16x256xf32>, vector<8x256xf32> -> vector<8x256xf32>
    %174 = vector.broadcast %4 : vector<8x1xf32> to vector<8x256xf32>
    %175 = arith.addf %173, %174 : vector<8x256xf32>
    %cst_81 = arith.constant dense<0.000000e+00> : vector<8x256xf32>
    %176 = tpu.matmul %39, %113, %cst_81 {dimension_numbers = #tpu.dot_dimension_numbers<[1], [0], [0], [1], [0, 0, 1, 1], [], []>} : vector<8x4xf32>, vector<4x256xf32>, vector<8x256xf32> -> vector<8x256xf32>
    %177 = vector.broadcast %40 : vector<8x1xf32> to vector<8x256xf32>
    %178 = arith.addf %176, %177 : vector<8x256xf32>
    %179 = arith.addf %175, %178 : vector<8x256xf32>
    %c1_82 = arith.constant 1 : index
    %c0_83 = arith.constant 0 : index
    %c0_84 = arith.constant 0 : index
    %180 = vector.load %arg11[%c1_82, %c0_83, %c0_84] : memref<2x8x256xf32, #tpu.memory_space<vmem>>, vector<1x8x256xf32>
    %181 = vector.shape_cast %180 : vector<1x8x256xf32> to vector<8x256xf32>
    %182 = vector.shape_cast %179 : vector<8x256xf32> to vector<1x8x256xf32>
    tpu.vector_store %arg11[%c1_82, %c0_83, %c0_84], %182 {strides = array<i32>} : memref<2x8x256xf32, #tpu.memory_space<vmem>>, vector<1x8x256xf32>,
    return
  }
  func.func @transform_0(%arg0: i32) -> (i32, i32, i32) {
    %c0_i32 = arith.constant 0 : i32
    %c0_i32_0 = arith.constant 0 : i32
    %c0_i32_1 = arith.constant 0 : i32
    return %arg0, %c0_i32, %c0_i32_0 : i32, i32, i32
  }
  func.func @transform_1(%arg0: i32) -> (i32, i32, i32) {
    %c0_i32 = arith.constant 0 : i32
    %c0_i32_0 = arith.constant 0 : i32
    %c0_i32_1 = arith.constant 0 : i32
    %c0_i32_2 = arith.constant 0 : i32
    return %c0_i32, %c0_i32_0, %c0_i32_1 : i32, i32, i32
  }
  func.func @transform_2(%arg0: i32) -> (i32, i32) {
    %c0_i32 = arith.constant 0 : i32
    %c0_i32_0 = arith.constant 0 : i32
    %c0_i32_1 = arith.constant 0 : i32
    return %c0_i32, %c0_i32_0 : i32, i32
  }
  func.func @transform_3(%arg0: i32) -> (i32, i32) {
    %c0_i32 = arith.constant 0 : i32
    %c0_i32_0 = arith.constant 0 : i32
    %c0_i32_1 = arith.constant 0 : i32
    return %c0_i32, %c0_i32_0 : i32, i32
  }
  func.func @transform_4(%arg0: i32) -> (i32, i32, i32) {
    %c0_i32 = arith.constant 0 : i32
    %c0_i32_0 = arith.constant 0 : i32
    %c0_i32_1 = arith.constant 0 : i32
    %c0_i32_2 = arith.constant 0 : i32
    return %c0_i32, %c0_i32_0, %c0_i32_1 : i32, i32, i32
  }
  func.func @transform_5(%arg0: i32) -> (i32, i32) {
    %c0_i32 = arith.constant 0 : i32
    %c0_i32_0 = arith.constant 0 : i32
    %c0_i32_1 = arith.constant 0 : i32
    return %c0_i32, %c0_i32_0 : i32, i32
  }
  func.func @transform_6(%arg0: i32) -> (i32, i32) {
    %c0_i32 = arith.constant 0 : i32
    %c0_i32_0 = arith.constant 0 : i32
    %c0_i32_1 = arith.constant 0 : i32
    return %c0_i32, %c0_i32_0 : i32, i32
  }
  func.func @transform_7(%arg0: i32) -> (i32, i32) {
    %c0_i32 = arith.constant 0 : i32
    %c0_i32_0 = arith.constant 0 : i32
    %c0_i32_1 = arith.constant 0 : i32
    return %c0_i32, %c0_i32_0 : i32, i32
  }
  func.func @transform_8(%arg0: i32) -> (i32, i32) {
    %c0_i32 = arith.constant 0 : i32
    %c0_i32_0 = arith.constant 0 : i32
    %c0_i32_1 = arith.constant 0 : i32
    return %c0_i32, %c0_i32_0 : i32, i32
  }
  func.func @transform_9(%arg0: i32) -> (i32, i32) {
    %c0_i32 = arith.constant 0 : i32
    %c0_i32_0 = arith.constant 0 : i32
    %c0_i32_1 = arith.constant 0 : i32
    return %c0_i32, %c0_i32_0 : i32, i32
  }
  func.func @transform_10(%arg0: i32) -> (i32, i32, i32) {
    %c0_i32 = arith.constant 0 : i32
    %c0_i32_0 = arith.constant 0 : i32
    %c0_i32_1 = arith.constant 0 : i32
    return %arg0, %c0_i32, %c0_i32_0 : i32, i32, i32
  }
}

</mosaic_0001>

<llo_original>
// kernel: tpu_custom_call.1
$region0: #{tpu_custom_call.1}
  #allocation0 [shape = 'u32[]', space=smem, size = 0x4, offset = 0x4, fixed_abs, tag = 'smem constant byte address 0x4 - core index']
  #allocation1 [shape = 'u32[144,128]{1,0:T(1,128)}', space=vmem, size = 0x12000, scoped, tag = 'internal scratch']
  %s0 = inlined_call_operand.vmem [shape: f32[2,4,256], index: 0, kind: input, shape index: {}]
  %s1 = inlined_call_operand.vmem [shape: f32[9,1,256], index: 1, kind: input, shape index: {}]
  %s2 = inlined_call_operand.vmem [shape: f32[16,4], index: 2, kind: input, shape index: {}]
  %s3 = inlined_call_operand.vmem [shape: f32[16,1], index: 3, kind: input, shape index: {}]
  %s4 = inlined_call_operand.vmem [shape: f32[9,16,1], index: 4, kind: input, shape index: {}]
  %s5 = inlined_call_operand.vmem [shape: f32[16,1], index: 5, kind: input, shape index: {}]
  %s6 = inlined_call_operand.vmem [shape: f32[8,16], index: 6, kind: input, shape index: {}]
  %s7 = inlined_call_operand.vmem [shape: f32[8,1], index: 7, kind: input, shape index: {}]
  %s8 = inlined_call_operand.vmem [shape: f32[8,4], index: 8, kind: input, shape index: {}]
  %s9 = inlined_call_operand.vmem [shape: f32[8,1], index: 9, kind: input, shape index: {}]
  %s10 = inlined_call_operand.hbm [shape: f32[2,8,256], index: 10, kind: output, shape index: {}]
  %s11 = sld [smem:[#allocation0]]
  $region50: #{tpu_custom_call.1} parent=0
    _
  %s13 = ssub.s32 1, %s11
  %s14 = scalar_select 0, %s13, %s11
  $region1: #{tpu_custom_call.1} parent=0
    #allocation2 [shape = 'u8[16384]{0}', space=vmem, size = 0x4000, scoped, tag = 'output window, operand 0, single buffered']
    #allocation3 [shape = 's32[1]{0}', space=sflag, size = 0x4, scoped, tag = 'scoped memory for tpu_custom_call.1']
    %15 = vsyncpa [#allocation3], 0
    // Predicated region
    $region2: #{tpu_custom_call.1} parent=1 // pred_check
      _
    $region3: #{tpu_custom_call.1} parent=1 // pred_check_branch
      %17 = sbr.rel (0) target = $region5
    $region4: #{tpu_custom_call.1} parent=1 // pred_region
      _
    $region5: #{tpu_custom_call.1} parent=1 // pred_fallthru
      _
    // Predicated region
    $region6: #{tpu_custom_call.1} parent=1 // pred_check
      _
    $region7: #{tpu_custom_call.1} parent=1 // pred_check_branch
      %19 = sbr.rel (0) target = $region9
    $region8: #{tpu_custom_call.1} parent=1 // pred_region
      _
    $region9: #{tpu_custom_call.1} parent=1 // pred_fallthru
      _
    // Predicated region
    $region10: #{tpu_custom_call.1} parent=1 // pred_check
      _
    $region11: #{tpu_custom_call.1} parent=1 // pred_check_branch
      %21 = sbr.rel (0) target = $region13
    $region12: #{tpu_custom_call.1} parent=1 // pred_region
      _
    $region13: #{tpu_custom_call.1} parent=1 // pred_fallthru
      _
    // Predicated region
    $region14: #{tpu_custom_call.1} parent=1 // pred_check
      _
    $region15: #{tpu_custom_call.1} parent=1 // pred_check_branch
      %23 = sbr.rel (0) target = $region17
    $region16: #{tpu_custom_call.1} parent=1 // pred_region
      _
    $region17: #{tpu_custom_call.1} parent=1 // pred_fallthru
      _
    // Predicated region
    $region18: #{tpu_custom_call.1} parent=1 // pred_check
      _
    $region19: #{tpu_custom_call.1} parent=1 // pred_check_branch
      %25 = sbr.rel (0) target = $region21
    $region20: #{tpu_custom_call.1} parent=1 // pred_region
      _
    $region21: #{tpu_custom_call.1} parent=1 // pred_fallthru
      _
    // Predicated region
    $region22: #{tpu_custom_call.1} parent=1 // pred_check
      _
    $region23: #{tpu_custom_call.1} parent=1 // pred_check_branch
      %27 = sbr.rel (0) target = $region25
    $region24: #{tpu_custom_call.1} parent=1 // pred_region
      _
    $region25: #{tpu_custom_call.1} parent=1 // pred_fallthru
      _
    // Predicated region
    $region26: #{tpu_custom_call.1} parent=1 // pred_check
      _
    $region27: #{tpu_custom_call.1} parent=1 // pred_check_branch
      %29 = sbr.rel (0) target = $region29
    $region28: #{tpu_custom_call.1} parent=1 // pred_region
      _
    $region29: #{tpu_custom_call.1} parent=1 // pred_fallthru
      _
    // Predicated region
    $region30: #{tpu_custom_call.1} parent=1 // pred_check
      _
    $region31: #{tpu_custom_call.1} parent=1 // pred_check_branch
      %31 = sbr.rel (0) target = $region33
    $region32: #{tpu_custom_call.1} parent=1 // pred_region
      _
    $region33: #{tpu_custom_call.1} parent=1 // pred_fallthru
      _
    // Predicated region
    $region34: #{tpu_custom_call.1} parent=1 // pred_check
      _
    $region35: #{tpu_custom_call.1} parent=1 // pred_check_branch
      %33 = sbr.rel (0) target = $region37
    $region36: #{tpu_custom_call.1} parent=1 // pred_region
      _
    $region37: #{tpu_custom_call.1} parent=1 // pred_fallthru
      _
    // Predicated region
    $region38: #{tpu_custom_call.1} parent=1 // pred_check
      _
    $region39: #{tpu_custom_call.1} parent=1 // pred_check_branch
      %35 = sbr.rel (0) target = $region41
    $region40: #{tpu_custom_call.1} parent=1 // pred_region
      _
    $region41: #{tpu_custom_call.1} parent=1 // pred_fallthru
      _
    %v36 = vld [vmem:[%s2] sm:$0xff]
    %v37 = vld [vmem:[%s2 + $0x8] sm:$0xff]
    %v38 = vld [vmem:[%s3] sm:$0xff]
    %v39 = vld [vmem:[%s3 + $0x8] sm:$0xff]
    %v40 = vld [vmem:[%s5] sm:$0xff]
    %v41 = vld [vmem:[%s5 + $0x8] sm:$0xff]
    %v42 = vld [vmem:[%s6] sm:$0xff]
    %v43 = vld [vmem:[%s7] sm:$0xff]
    %v44 = vld [vmem:[%s4] sm:$0xff]
    %v45 = vld [vmem:[%s4 + $0x8] sm:$0xff]
    %s46 = scalar_lea.vmem %s4, 16
    %v47 = vld [vmem:[%s46] sm:$0xff]
    %v48 = vld [vmem:[%s46 + $0x8] sm:$0xff]
    %s49 = scalar_lea.vmem %s4, 32
    %v50 = vld [vmem:[%s49] sm:$0xff]
    %v51 = vld [vmem:[%s49 + $0x8] sm:$0xff]
    %s52 = scalar_lea.vmem %s4, 48
    %v53 = vld [vmem:[%s52] sm:$0xff]
    %v54 = vld [vmem:[%s52 + $0x8] sm:$0xff]
    %s55 = scalar_lea.vmem %s4, 64
    %v56 = vld [vmem:[%s55] sm:$0xff]
    %v57 = vld [vmem:[%s55 + $0x8] sm:$0xff]
    %s58 = scalar_lea.vmem %s4, 80
    %v59 = vld [vmem:[%s58] sm:$0xff]
    %v60 = vld [vmem:[%s58 + $0x8] sm:$0xff]
    %s61 = scalar_lea.vmem %s4, 96
    %v62 = vld [vmem:[%s61] sm:$0xff]
    %v63 = vld [vmem:[%s61 + $0x8] sm:$0xff]
    %s64 = scalar_lea.vmem %s4, 112
    %v65 = vld [vmem:[%s64] sm:$0xff]
    %v66 = vld [vmem:[%s64 + $0x8] sm:$0xff]
    %s67 = scalar_lea.vmem %s4, 128
    %v68 = vld [vmem:[%s67] sm:$0xff]
    %v69 = vld [vmem:[%s67 + $0x8] sm:$0xff]
    %v70 = vld [vmem:[%s1] sm:$0x3]
    %s71 = scalar_lea.vmem %s1, 2
    %v72 = vld [vmem:[%s71] sm:$0x3]
    %s73 = scalar_lea.vmem %s1, 4
    %v74 = vld [vmem:[%s73] sm:$0x3]
    %s75 = scalar_lea.vmem %s1, 6
    %v76 = vld [vmem:[%s75] sm:$0x3]
    %s77 = scalar_lea.vmem %s1, 10
    %v78 = vld [vmem:[%s77] sm:$0x3]
    %s79 = scalar_lea.vmem %s1, 12
    %v80 = vld [vmem:[%s79] sm:$0x3]
    %s81 = scalar_lea.vmem %s1, 14
    %v82 = vld [vmem:[%s81] sm:$0x3]
    %s83 = scalar_lea.vmem %s1, 16
    %v84 = vld [vmem:[%s83] sm:$0x3]
    %v85 = vld [vmem:[%s8] sm:$0xff]
    %v86 = vld [vmem:[%s9] sm:$0xff]
    %v87 = vld [vmem:[%s0] sm:$0xff]
    %89 = vset.pattern.permute.xlu0 0
    %90 = vperm.xlu0 %89, %v38
    %v91 = vpop.permute.xlu0 %90
    %94 = vset.pattern.permute.xlu0 0
    %95 = vperm.xlu0 %94, %v39
    %v96 = vpop.permute.xlu0 %95
    %v99 = vcombine.high %v87, %v87
    %vm100 = vcmask 31744
    %v102 = vsel %vm100, %v36, 0
    %v105 = vsel %vm100, %v37, 0
    %vm107 = vcmask 1043456
    %v108 = vsel %vm107, %v87, 0
    %v110 = vsel %vm107, %v99, 0
    %112 = vmatprep.subr.mxu0 0.0
    %113 = vmatpush1.msra.mxu0 0.0
    %114 = vmatprep.subr.mxu0 0.0
    %115 = vmatpush1.msra.mxu0 0.0
    %116 = vmatprep.subr.mxu0 0.0
    %117 = vmatpush1.msra.mxu0 0.0
    %118 = vmatprep.subr.mxu0 0.0
    %119 = vmatpush1.msra.mxu0 0.0
    %120 = vmatprep.subr.mxu0 0.0
    %121 = vmatpush1.msra.mxu0 0.0
    %122 = vmatprep.subr.mxu0 0.0
    %123 = vmatpush1.msra.mxu0 0.0
    %124 = vmatprep.subr.mxu0 0.0
    %125 = vmatpush1.msra.mxu0 0.0
    %126 = vmatprep.subr.mxu0 0.0
    %127 = vmatpush1.msra.mxu0 0.0
    %128 = vmatprep.subr.mxu0 0.0
    %129 = vmatpush1.msra.mxu0 0.0
    %130 = vmatprep.subr.mxu0 0.0
    %131 = vmatpush1.msra.mxu0 0.0
    %132 = vmatprep.subr.mxu0 0.0
    %133 = vmatpush1.msra.mxu0 0.0
    %134 = vmatprep.subr.mxu0 0.0
    %135 = vmatpush1.msra.mxu0 0.0
    %136 = vmatprep.subr.mxu0 0.0
    %137 = vmatpush1.msra.mxu0 0.0
    %138 = vmatprep.subr.mxu0 0.0
    %139 = vmatpush1.msra.mxu0 0.0
    %140 = vmatprep.subr.mxu0 0.0
    %141 = vmatpush1.msra.mxu0 0.0
    %142 = vmatprep.subr.mxu0 %v110
    %143 = vmatpush1.msra.mxu0 %v108
    %144 = vmatprep.subr.mxu0 0.0
    %145 = vmatpush2.msra.mxu0 0.0
    %146 = vmatprep.subr.mxu0 0.0
    %147 = vmatpush2.msra.mxu0 0.0
    %148 = vmatprep.subr.mxu0 0.0
    %149 = vmatpush2.msra.mxu0 0.0
    %150 = vmatprep.subr.mxu0 0.0
    %151 = vmatpush2.msra.mxu0 0.0
    %152 = vmatprep.subr.mxu0 0.0
    %153 = vmatpush2.msra.mxu0 0.0
    %154 = vmatprep.subr.mxu0 0.0
    %155 = vmatpush2.msra.mxu0 0.0
    %156 = vmatprep.subr.mxu0 0.0
    %157 = vmatpush2.msra.mxu0 0.0
    %158 = vmatprep.subr.mxu0 0.0
    %159 = vmatpush2.msra.mxu0 0.0
    %160 = vmatprep.subr.mxu0 0.0
    %161 = vmatpush2.msra.mxu0 0.0
    %162 = vmatprep.subr.mxu0 0.0
    %163 = vmatpush2.msra.mxu0 0.0
    %164 = vmatprep.subr.mxu0 0.0
    %165 = vmatpush2.msra.mxu0 0.0
    %166 = vmatprep.subr.mxu0 0.0
    %167 = vmatpush2.msra.mxu0 0.0
    %168 = vmatprep.subr.mxu0 0.0
    %169 = vmatpush2.msra.mxu0 0.0
    %170 = vmatprep.subr.mxu0 0.0
    %171 = vmatpush2.msra.mxu0 0.0
    %172 = vmatprep.subr.mxu0 0.0
    %173 = vmatpush2.msra.mxu0 0.0
    %174 = vmatprep.subr.mxu0 0.0
    %175 = vmatpush2.msra.mxu0 0.0
    %176 = vmatprep.mubr.f32.mxu0 0.0
    %177 = vmatmul.mubr.f32.gmra.mxu0 %v102
    %v178 = vpop.f32.mrf.mxu0
    %v179 = vadd.f32 %v91, %v178
    %v180 = vpop.f32.mrf.mxu0
    %v181 = vadd.f32 %v91, %v180
    %182 = vmatprep.mubr.f32.mxu0 0.0
    %183 = vmatmul.mubr.f32.gmra.mxu0 %v105
    %v184 = vpop.f32.mrf.mxu0
    %v185 = vadd.f32 %v96, %v184
    %v186 = vpop.f32.mrf.mxu0
    %v187 = vadd.f32 %v96, %v186
    %188 = vdwg.mxu0
    %v189 = vmax.f32 %v179, 0.0
    %v190 = vmax.f32 %v181, 0.0
    %v191 = vmax.f32 %v185, 0.0
    %v192 = vmax.f32 %v187, 0.0
    %193 = vrot.lane.b32.xlu0 %v189, 17
    %v194 = vpop.permute.xlu0 %193
    %195 = vrot.lane.b32.xlu0 %v191, 17
    %v196 = vpop.permute.xlu0 %195
    %197 = vrot.lane.b32.xlu0 %v190, 17
    %v198 = vpop.permute.xlu0 %197
    %199 = vrot.lane.b32.xlu0 %v192, 17
    %v200 = vpop.permute.xlu0 %199
    %v201 = vlaneseq
    %v202 = vand.u32 %v201, 127
    %vm203 = vcmp.lt.s32.totalorder %v202, 17
    %v204 = vsel %vm203, %v194, %v198
    %v205 = vsel %vm203, %v196, %v200
    %v206 = vsel %vm203, %v198, %v194
    %v207 = vsel %vm203, %v200, %v196
    %v209 = vlaneseq
    %v210 = vshrl.u32 %v209, 7
    %v211 = vsub.s32 0, %v210
    %v212 = vrot.slane %v70, %v211
    %v213 = vlaneseq
    %v214 = vshrl.u32 %v213, 7
    %v215 = vsub.s32 1, %v214
    %v216 = vrot.slane %v70, %v215
    %v219 = vmul.f32 %v206, %v212
    %v220 = vmul.f32 %v204, %v216
    %v221 = vmul.f32 %v207, %v212
    %v222 = vmul.f32 %v205, %v216
    %224 = vset.pattern.permute.xlu0 0
    %225 = vperm.xlu0 %224, %v44
    %v226 = vpop.permute.xlu0 %225
    %229 = vset.pattern.permute.xlu0 0
    %230 = vperm.xlu0 %229, %v45
    %v231 = vpop.permute.xlu0 %230
    %v233 = vmul.f32 %v219, %v226
    %v234 = vmul.f32 %v220, %v226
    %v235 = vmul.f32 %v221, %v231
    %v236 = vmul.f32 %v222, %v231
    %238 = vset.pattern.permute.xlu0 0
    %239 = vperm.xlu0 %238, %v40
    %v240 = vpop.permute.xlu0 %239
    %243 = vset.pattern.permute.xlu0 0
    %244 = vperm.xlu0 %243, %v41
    %v245 = vpop.permute.xlu0 %244
    %v247 = vadd.f32 %v233, %v240
    %v248 = vadd.f32 %v234, %v240
    %v249 = vadd.f32 %v235, %v245
    %v250 = vadd.f32 %v236, %v245
    %251 = vrot.lane.b32.xlu0 %v189, 16
    %v252 = vpop.permute.xlu0 %251
    %253 = vrot.lane.b32.xlu0 %v191, 16
    %v254 = vpop.permute.xlu0 %253
    %255 = vrot.lane.b32.xlu0 %v190, 16
    %v256 = vpop.permute.xlu0 %255
    %257 = vrot.lane.b32.xlu0 %v192, 16
    %v258 = vpop.permute.xlu0 %257
    %vm259 = vcmp.lt.s32.totalorder %v202, 16
    %v260 = vsel %vm259, %v252, %v256
    %v261 = vsel %vm259, %v254, %v258
    %v262 = vsel %vm259, %v256, %v252
    %v263 = vsel %vm259, %v258, %v254
    %v265 = vlaneseq
    %v266 = vshrl.u32 %v265, 7
    %v267 = vsub.s32 0, %v266
    %v268 = vrot.slane %v72, %v267
    %v269 = vlaneseq
    %v270 = vshrl.u32 %v269, 7
    %v271 = vsub.s32 1, %v270
    %v272 = vrot.slane %v72, %v271
    %v275 = vmul.f32 %v262, %v268
    %v276 = vmul.f32 %v260, %v272
    %v277 = vmul.f32 %v263, %v268
    %v278 = vmul.f32 %v261, %v272
    %280 = vset.pattern.permute.xlu0 0
    %281 = vperm.xlu0 %280, %v47
    %v282 = vpop.permute.xlu0 %281
    %285 = vset.pattern.permute.xlu0 0
    %286 = vperm.xlu0 %285, %v48
    %v287 = vpop.permute.xlu0 %286
    %v289 = vmul.f32 %v275, %v282
    %v290 = vmul.f32 %v276, %v282
    %v291 = vmul.f32 %v277, %v287
    %v292 = vmul.f32 %v278, %v287
    %v293 = vadd.f32 %v247, %v289
    %v294 = vadd.f32 %v248, %v290
    %v295 = vadd.f32 %v249, %v291
    %v296 = vadd.f32 %v250, %v292
    %297 = vrot.lane.b32.xlu0 %v189, 15
    %v298 = vpop.permute.xlu0 %297
    %299 = vrot.lane.b32.xlu0 %v191, 15
    %v300 = vpop.permute.xlu0 %299
    %301 = vrot.lane.b32.xlu0 %v190, 15
    %v302 = vpop.permute.xlu0 %301
    %303 = vrot.lane.b32.xlu0 %v192, 15
    %v304 = vpop.permute.xlu0 %303
    %vm305 = vcmp.lt.s32.totalorder %v202, 15
    %v306 = vsel %vm305, %v298, %v302
    %v307 = vsel %vm305, %v300, %v304
    %v308 = vsel %vm305, %v302, %v298
    %v309 = vsel %vm305, %v304, %v300
    %v311 = vlaneseq
    %v312 = vshrl.u32 %v311, 7
    %v313 = vsub.s32 0, %v312
    %v314 = vrot.slane %v74, %v313
    %v315 = vlaneseq
    %v316 = vshrl.u32 %v315, 7
    %v317 = vsub.s32 1, %v316
    %v318 = vrot.slane %v74, %v317
    %v321 = vmul.f32 %v308, %v314
    %v322 = vmul.f32 %v306, %v318
    %v323 = vmul.f32 %v309, %v314
    %v324 = vmul.f32 %v307, %v318
    %326 = vset.pattern.permute.xlu0 0
    %327 = vperm.xlu0 %326, %v50
    %v328 = vpop.permute.xlu0 %327
    %331 = vset.pattern.permute.xlu0 0
    %332 = vperm.xlu0 %331, %v51
    %v333 = vpop.permute.xlu0 %332
    %v335 = vmul.f32 %v321, %v328
    %v336 = vmul.f32 %v322, %v328
    %v337 = vmul.f32 %v323, %v333
    %v338 = vmul.f32 %v324, %v333
    %v339 = vadd.f32 %v293, %v335
    %v340 = vadd.f32 %v294, %v336
    %v341 = vadd.f32 %v295, %v337
    %v342 = vadd.f32 %v296, %v338
    %343 = vrot.lane.b32.xlu0 %v189, 1
    %v344 = vpop.permute.xlu0 %343
    %345 = vrot.lane.b32.xlu0 %v191, 1
    %v346 = vpop.permute.xlu0 %345
    %347 = vrot.lane.b32.xlu0 %v190, 1
    %v348 = vpop.permute.xlu0 %347
    %349 = vrot.lane.b32.xlu0 %v192, 1
    %v350 = vpop.permute.xlu0 %349
    %vm351 = vcmp.lt.s32.totalorder %v202, 1
    %v352 = vsel %vm351, %v344, %v348
    %v353 = vsel %vm351, %v346, %v350
    %v354 = vsel %vm351, %v348, %v344
    %v355 = vsel %vm351, %v350, %v346
    %v357 = vlaneseq
    %v358 = vshrl.u32 %v357, 7
    %v359 = vsub.s32 0, %v358
    %v360 = vrot.slane %v76, %v359
    %v361 = vlaneseq
    %v362 = vshrl.u32 %v361, 7
    %v363 = vsub.s32 1, %v362
    %v364 = vrot.slane %v76, %v363
    %v367 = vmul.f32 %v354, %v360
    %v368 = vmul.f32 %v352, %v364
    %v369 = vmul.f32 %v355, %v360
    %v370 = vmul.f32 %v353, %v364
    %372 = vset.pattern.permute.xlu0 0
    %373 = vperm.xlu0 %372, %v53
    %v374 = vpop.permute.xlu0 %373
    %377 = vset.pattern.permute.xlu0 0
    %378 = vperm.xlu0 %377, %v54
    %v379 = vpop.permute.xlu0 %378
    %v381 = vmul.f32 %v367, %v374
    %v382 = vmul.f32 %v368, %v374
    %v383 = vmul.f32 %v369, %v379
    %v384 = vmul.f32 %v370, %v379
    %v385 = vadd.f32 %v339, %v381
    %v386 = vadd.f32 %v340, %v382
    %v387 = vadd.f32 %v341, %v383
    %v388 = vadd.f32 %v342, %v384
    %390 = vset.pattern.permute.xlu0 0
    %391 = vperm.xlu0 %390, %v56
    %v392 = vpop.permute.xlu0 %391
    %395 = vset.pattern.permute.xlu0 0
    %396 = vperm.xlu0 %395, %v57
    %v397 = vpop.permute.xlu0 %396
    %v399 = vmul.f32 %v189, %v392
    %v400 = vmul.f32 %v190, %v392
    %v401 = vmul.f32 %v191, %v397
    %v402 = vmul.f32 %v192, %v397
    %v403 = vadd.f32 %v385, %v399
    %v404 = vadd.f32 %v386, %v400
    %v405 = vadd.f32 %v387, %v401
    %v406 = vadd.f32 %v388, %v402
    %407 = vrot.lane.b32.xlu0 %v189, 127
    %v408 = vpop.permute.xlu0 %407
    %409 = vrot.lane.b32.xlu0 %v191, 127
    %v410 = vpop.permute.xlu0 %409
    %411 = vrot.lane.b32.xlu0 %v190, 127
    %v412 = vpop.permute.xlu0 %411
    %413 = vrot.lane.b32.xlu0 %v192, 127
    %v414 = vpop.permute.xlu0 %413
    %vm415 = vcmp.lt.s32.totalorder %v202, 127
    %v416 = vsel %vm415, %v408, %v412
    %v417 = vsel %vm415, %v410, %v414
    %v418 = vsel %vm415, %v412, %v408
    %v419 = vsel %vm415, %v414, %v410
    %v421 = vlaneseq
    %v422 = vshrl.u32 %v421, 7
    %v423 = vsub.s32 0, %v422
    %v424 = vrot.slane %v78, %v423
    %v425 = vlaneseq
    %v426 = vshrl.u32 %v425, 7
    %v427 = vsub.s32 1, %v426
    %v428 = vrot.slane %v78, %v427
    %v431 = vmul.f32 %v416, %v424
    %v432 = vmul.f32 %v418, %v428
    %v433 = vmul.f32 %v417, %v424
    %v434 = vmul.f32 %v419, %v428
    %436 = vset.pattern.permute.xlu0 0
    %437 = vperm.xlu0 %436, %v59
    %v438 = vpop.permute.xlu0 %437
    %441 = vset.pattern.permute.xlu0 0
    %442 = vperm.xlu0 %441, %v60
    %v443 = vpop.permute.xlu0 %442
    %v445 = vmul.f32 %v431, %v438
    %v446 = vmul.f32 %v432, %v438
    %v447 = vmul.f32 %v433, %v443
    %v448 = vmul.f32 %v434, %v443
    %v449 = vadd.f32 %v403, %v445
    %v450 = vadd.f32 %v404, %v446
    %v451 = vadd.f32 %v405, %v447
    %v452 = vadd.f32 %v406, %v448
    %453 = vrot.lane.b32.xlu0 %v189, 113
    %v454 = vpop.permute.xlu0 %453
    %455 = vrot.lane.b32.xlu0 %v191, 113
    %v456 = vpop.permute.xlu0 %455
    %457 = vrot.lane.b32.xlu0 %v190, 113
    %v458 = vpop.permute.xlu0 %457
    %459 = vrot.lane.b32.xlu0 %v192, 113
    %v460 = vpop.permute.xlu0 %459
    %vm461 = vcmp.lt.s32.totalorder %v202, 113
    %v462 = vsel %vm461, %v454, %v458
    %v463 = vsel %vm461, %v456, %v460
    %v464 = vsel %vm461, %v458, %v454
    %v465 = vsel %vm461, %v460, %v456
    %v467 = vlaneseq
    %v468 = vshrl.u32 %v467, 7
    %v469 = vsub.s32 0, %v468
    %v470 = vrot.slane %v80, %v469
    %v471 = vlaneseq
    %v472 = vshrl.u32 %v471, 7
    %v473 = vsub.s32 1, %v472
    %v474 = vrot.slane %v80, %v473
    %v477 = vmul.f32 %v462, %v470
    %v478 = vmul.f32 %v464, %v474
    %v479 = vmul.f32 %v463, %v470
    %v480 = vmul.f32 %v465, %v474
    %482 = vset.pattern.permute.xlu0 0
    %483 = vperm.xlu0 %482, %v62
    %v484 = vpop.permute.xlu0 %483
    %487 = vset.pattern.permute.xlu0 0
    %488 = vperm.xlu0 %487, %v63
    %v489 = vpop.permute.xlu0 %488
    %v491 = vmul.f32 %v477, %v484
    %v492 = vmul.f32 %v478, %v484
    %v493 = vmul.f32 %v479, %v489
    %v494 = vmul.f32 %v480, %v489
    %v495 = vadd.f32 %v449, %v491
    %v496 = vadd.f32 %v450, %v492
    %v497 = vadd.f32 %v451, %v493
    %v498 = vadd.f32 %v452, %v494
    %499 = vrot.lane.b32.xlu0 %v189, 112
    %v500 = vpop.permute.xlu0 %499
    %501 = vrot.lane.b32.xlu0 %v191, 112
    %v502 = vpop.permute.xlu0 %501
    %503 = vrot.lane.b32.xlu0 %v190, 112
    %v504 = vpop.permute.xlu0 %503
    %505 = vrot.lane.b32.xlu0 %v192, 112
    %v506 = vpop.permute.xlu0 %505
    %vm507 = vcmp.lt.s32.totalorder %v202, 112
    %v508 = vsel %vm507, %v500, %v504
    %v509 = vsel %vm507, %v502, %v506
    %v510 = vsel %vm507, %v504, %v500
    %v511 = vsel %vm507, %v506, %v502
    %v513 = vlaneseq
    %v514 = vshrl.u32 %v513, 7
    %v515 = vsub.s32 0, %v514
    %v516 = vrot.slane %v82, %v515
    %v517 = vlaneseq
    %v518 = vshrl.u32 %v517, 7
    %v519 = vsub.s32 1, %v518
    %v520 = vrot.slane %v82, %v519
    %v523 = vmul.f32 %v508, %v516
    %v524 = vmul.f32 %v510, %v520
    %v525 = vmul.f32 %v509, %v516
    %v526 = vmul.f32 %v511, %v520
    %528 = vset.pattern.permute.xlu0 0
    %529 = vperm.xlu0 %528, %v65
    %v530 = vpop.permute.xlu0 %529
    %533 = vset.pattern.permute.xlu0 0
    %534 = vperm.xlu0 %533, %v66
    %v535 = vpop.permute.xlu0 %534
    %v537 = vmul.f32 %v523, %v530
    %v538 = vmul.f32 %v524, %v530
    %v539 = vmul.f32 %v525, %v535
    %v540 = vmul.f32 %v526, %v535
    %v541 = vadd.f32 %v495, %v537
    %v542 = vadd.f32 %v496, %v538
    %v543 = vadd.f32 %v497, %v539
    %v544 = vadd.f32 %v498, %v540
    %545 = vrot.lane.b32.xlu0 %v189, 111
    %v546 = vpop.permute.xlu0 %545
    %547 = vrot.lane.b32.xlu0 %v191, 111
    %v548 = vpop.permute.xlu0 %547
    %549 = vrot.lane.b32.xlu0 %v190, 111
    %v550 = vpop.permute.xlu0 %549
    %551 = vrot.lane.b32.xlu0 %v192, 111
    %v552 = vpop.permute.xlu0 %551
    %vm553 = vcmp.lt.s32.totalorder %v202, 111
    %v554 = vsel %vm553, %v546, %v550
    %v555 = vsel %vm553, %v548, %v552
    %v556 = vsel %vm553, %v550, %v546
    %v557 = vsel %vm553, %v552, %v548
    %v559 = vlaneseq
    %v560 = vshrl.u32 %v559, 7
    %v561 = vsub.s32 0, %v560
    %v562 = vrot.slane %v84, %v561
    %v563 = vlaneseq
    %v564 = vshrl.u32 %v563, 7
    %v565 = vsub.s32 1, %v564
    %v566 = vrot.slane %v84, %v565
    %v569 = vmul.f32 %v554, %v562
    %v570 = vmul.f32 %v556, %v566
    %v571 = vmul.f32 %v555, %v562
    %v572 = vmul.f32 %v557, %v566
    %574 = vset.pattern.permute.xlu0 0
    %575 = vperm.xlu0 %574, %v68
    %v576 = vpop.permute.xlu0 %575
    %579 = vset.pattern.permute.xlu0 0
    %580 = vperm.xlu0 %579, %v69
    %v581 = vpop.permute.xlu0 %580
    %v583 = vmul.f32 %v569, %v576
    %v584 = vmul.f32 %v570, %v576
    %v585 = vmul.f32 %v571, %v581
    %v586 = vmul.f32 %v572, %v581
    %v587 = vadd.f32 %v541, %v583
    %v588 = vadd.f32 %v542, %v584
    %v589 = vadd.f32 %v543, %v585
    %v590 = vadd.f32 %v544, %v586
    %v591 = vmax.f32 %v587, 0.0
    %v592 = vmax.f32 %v588, 0.0
    %v593 = vmax.f32 %v589, 0.0
    %v594 = vmax.f32 %v590, 0.0
    %596 = vset.pattern.permute.xlu0 0
    %597 = vperm.xlu0 %596, %v43
    %v598 = vpop.permute.xlu0 %597
    %vm600 = vcmask 130048
    %v602 = vsel %vm600, %v42, 0
    %604 = vmatprep.subr.mxu0 0.0
    %605 = vmatpush1.msra.mxu0 0.0
    %606 = vmatprep.subr.mxu0 0.0
    %607 = vmatpush1.msra.mxu0 0.0
    %608 = vmatprep.subr.mxu0 0.0
    %609 = vmatpush1.msra.mxu0 0.0
    %610 = vmatprep.subr.mxu0 0.0
    %611 = vmatpush1.msra.mxu0 0.0
    %612 = vmatprep.subr.mxu0 0.0
    %613 = vmatpush1.msra.mxu0 0.0
    %614 = vmatprep.subr.mxu0 0.0
    %615 = vmatpush1.msra.mxu0 0.0
    %616 = vmatprep.subr.mxu0 0.0
    %617 = vmatpush1.msra.mxu0 0.0
    %618 = vmatprep.subr.mxu0 0.0
    %619 = vmatpush1.msra.mxu0 0.0
    %620 = vmatprep.subr.mxu0 0.0
    %621 = vmatpush1.msra.mxu0 0.0
    %622 = vmatprep.subr.mxu0 0.0
    %623 = vmatpush1.msra.mxu0 0.0
    %624 = vmatprep.subr.mxu0 0.0
    %625 = vmatpush1.msra.mxu0 0.0
    %626 = vmatprep.subr.mxu0 0.0
    %627 = vmatpush1.msra.mxu0 0.0
    %628 = vmatprep.subr.mxu0 0.0
    %629 = vmatpush1.msra.mxu0 0.0
    %630 = vmatprep.subr.mxu0 0.0
    %631 = vmatpush1.msra.mxu0 0.0
    %632 = vmatprep.subr.mxu0 %v594
    %633 = vmatpush1.msra.mxu0 %v593
    %634 = vmatprep.subr.mxu0 %v592
    %635 = vmatpush1.msra.mxu0 %v591
    %636 = vmatprep.subr.mxu0 0.0
    %637 = vmatpush2.msra.mxu0 0.0
    %638 = vmatprep.subr.mxu0 0.0
    %639 = vmatpush2.msra.mxu0 0.0
    %640 = vmatprep.subr.mxu0 0.0
    %641 = vmatpush2.msra.mxu0 0.0
    %642 = vmatprep.subr.mxu0 0.0
    %643 = vmatpush2.msra.mxu0 0.0
    %644 = vmatprep.subr.mxu0 0.0
    %645 = vmatpush2.msra.mxu0 0.0
    %646 = vmatprep.subr.mxu0 0.0
    %647 = vmatpush2.msra.mxu0 0.0
    %648 = vmatprep.subr.mxu0 0.0
    %649 = vmatpush2.msra.mxu0 0.0
    %650 = vmatprep.subr.mxu0 0.0
    %651 = vmatpush2.msra.mxu0 0.0
    %652 = vmatprep.subr.mxu0 0.0
    %653 = vmatpush2.msra.mxu0 0.0
    %654 = vmatprep.subr.mxu0 0.0
    %655 = vmatpush2.msra.mxu0 0.0
    %656 = vmatprep.subr.mxu0 0.0
    %657 = vmatpush2.msra.mxu0 0.0
    %658 = vmatprep.subr.mxu0 0.0
    %659 = vmatpush2.msra.mxu0 0.0
    %660 = vmatprep.subr.mxu0 0.0
    %661 = vmatpush2.msra.mxu0 0.0
    %662 = vmatprep.subr.mxu0 0.0
    %663 = vmatpush2.msra.mxu0 0.0
    %664 = vmatprep.subr.mxu0 0.0
    %665 = vmatpush2.msra.mxu0 0.0
    %666 = vmatprep.subr.mxu0 0.0
    %667 = vmatpush2.msra.mxu0 0.0
    %668 = vmatprep.mubr.f32.mxu0 0.0
    %669 = vmatmul.mubr.f32.gmra.mxu0 %v602
    %v670 = vpop.f32.mrf.mxu0
    %v671 = vadd.f32 %v598, %v670
    %v672 = vpop.f32.mrf.mxu0
    %v673 = vadd.f32 %v598, %v672
    %674 = vdwg.mxu0
    %676 = vset.pattern.permute.xlu0 0
    %677 = vperm.xlu0 %676, %v86
    %v678 = vpop.permute.xlu0 %677
    %v681 = vsel %vm100, %v85, 0
    %683 = vmatprep.subr.mxu0 0.0
    %684 = vmatpush1.msra.mxu0 0.0
    %685 = vmatprep.subr.mxu0 0.0
    %686 = vmatpush1.msra.mxu0 0.0
    %687 = vmatprep.subr.mxu0 0.0
    %688 = vmatpush1.msra.mxu0 0.0
    %689 = vmatprep.subr.mxu0 0.0
    %690 = vmatpush1.msra.mxu0 0.0
    %691 = vmatprep.subr.mxu0 0.0
    %692 = vmatpush1.msra.mxu0 0.0
    %693 = vmatprep.subr.mxu0 0.0
    %694 = vmatpush1.msra.mxu0 0.0
    %695 = vmatprep.subr.mxu0 0.0
    %696 = vmatpush1.msra.mxu0 0.0
    %697 = vmatprep.subr.mxu0 0.0
    %698 = vmatpush1.msra.mxu0 0.0
    %699 = vmatprep.subr.mxu0 0.0
    %700 = vmatpush1.msra.mxu0 0.0
    %701 = vmatprep.subr.mxu0 0.0
    %702 = vmatpush1.msra.mxu0 0.0
    %703 = vmatprep.subr.mxu0 0.0
    %704 = vmatpush1.msra.mxu0 0.0
    %705 = vmatprep.subr.mxu0 0.0
    %706 = vmatpush1.msra.mxu0 0.0
    %707 = vmatprep.subr.mxu0 0.0
    %708 = vmatpush1.msra.mxu0 0.0
    %709 = vmatprep.subr.mxu0 0.0
    %710 = vmatpush1.msra.mxu0 0.0
    %711 = vmatprep.subr.mxu0 0.0
    %712 = vmatpush1.msra.mxu0 0.0
    %713 = vmatprep.subr.mxu0 %v110
    %714 = vmatpush1.msra.mxu0 %v108
    %715 = vmatprep.subr.mxu0 0.0
    %716 = vmatpush2.msra.mxu0 0.0
    %717 = vmatprep.subr.mxu0 0.0
    %718 = vmatpush2.msra.mxu0 0.0
    %719 = vmatprep.subr.mxu0 0.0
    %720 = vmatpush2.msra.mxu0 0.0
    %721 = vmatprep.subr.mxu0 0.0
    %722 = vmatpush2.msra.mxu0 0.0
    %723 = vmatprep.subr.mxu0 0.0
    %724 = vmatpush2.msra.mxu0 0.0
    %725 = vmatprep.subr.mxu0 0.0
    %726 = vmatpush2.msra.mxu0 0.0
    %727 = vmatprep.subr.mxu0 0.0
    %728 = vmatpush2.msra.mxu0 0.0
    %729 = vmatprep.subr.mxu0 0.0
    %730 = vmatpush2.msra.mxu0 0.0
    %731 = vmatprep.subr.mxu0 0.0
    %732 = vmatpush2.msra.mxu0 0.0
    %733 = vmatprep.subr.mxu0 0.0
    %734 = vmatpush2.msra.mxu0 0.0
    %735 = vmatprep.subr.mxu0 0.0
    %736 = vmatpush2.msra.mxu0 0.0
    %737 = vmatprep.subr.mxu0 0.0
    %738 = vmatpush2.msra.mxu0 0.0
    %739 = vmatprep.subr.mxu0 0.0
    %740 = vmatpush2.msra.mxu0 0.0
    %741 = vmatprep.subr.mxu0 0.0
    %742 = vmatpush2.msra.mxu0 0.0
    %743 = vmatprep.subr.mxu0 0.0
    %744 = vmatpush2.msra.mxu0 0.0
    %745 = vmatprep.subr.mxu0 0.0
    %746 = vmatpush2.msra.mxu0 0.0
    %747 = vmatprep.mubr.f32.mxu0 0.0
    %748 = vmatmul.mubr.f32.gmra.mxu0 %v681
    %v749 = vpop.f32.mrf.mxu0
    %v750 = vadd.f32 %v678, %v749
    %v751 = vpop.f32.mrf.mxu0
    %v752 = vadd.f32 %v678, %v751
    %753 = vdwg.mxu0
    %v754 = vadd.f32 %v671, %v750
    %v755 = vadd.f32 %v673, %v752
    %756 = vst [vmem:[#allocation2] sm:$0xff] %v754
    %757 = vst [vmem:[#allocation2 + $0x8] sm:$0xff] %v755
    %s758 = scalar_lea.vmem %s0, 8
    %v759 = vld [vmem:[%s758] sm:$0xff]
    %v761 = vcombine.high %v759, %v759
    %v762 = vsel %vm107, %v759, 0
    %v764 = vsel %vm107, %v761, 0
    %766 = vmatprep.subr.mxu0 0.0
    %767 = vmatpush1.msra.mxu0 0.0
    %768 = vmatprep.subr.mxu0 0.0
    %769 = vmatpush1.msra.mxu0 0.0
    %770 = vmatprep.subr.mxu0 0.0
    %771 = vmatpush1.msra.mxu0 0.0
    %772 = vmatprep.subr.mxu0 0.0
    %773 = vmatpush1.msra.mxu0 0.0
    %774 = vmatprep.subr.mxu0 0.0
    %775 = vmatpush1.msra.mxu0 0.0
    %776 = vmatprep.subr.mxu0 0.0
    %777 = vmatpush1.msra.mxu0 0.0
    %778 = vmatprep.subr.mxu0 0.0
    %779 = vmatpush1.msra.mxu0 0.0
    %780 = vmatprep.subr.mxu0 0.0
    %781 = vmatpush1.msra.mxu0 0.0
    %782 = vmatprep.subr.mxu0 0.0
    %783 = vmatpush1.msra.mxu0 0.0
    %784 = vmatprep.subr.mxu0 0.0
    %785 = vmatpush1.msra.mxu0 0.0
    %786 = vmatprep.subr.mxu0 0.0
    %787 = vmatpush1.msra.mxu0 0.0
    %788 = vmatprep.subr.mxu0 0.0
    %789 = vmatpush1.msra.mxu0 0.0
    %790 = vmatprep.subr.mxu0 0.0
    %791 = vmatpush1.msra.mxu0 0.0
    %792 = vmatprep.subr.mxu0 0.0
    %793 = vmatpush1.msra.mxu0 0.0
    %794 = vmatprep.subr.mxu0 0.0
    %795 = vmatpush1.msra.mxu0 0.0
    %796 = vmatprep.subr.mxu0 %v764
    %797 = vmatpush1.msra.mxu0 %v762
    %798 = vmatprep.subr.mxu0 0.0
    %799 = vmatpush2.msra.mxu0 0.0
    %800 = vmatprep.subr.mxu0 0.0
    %801 = vmatpush2.msra.mxu0 0.0
    %802 = vmatprep.subr.mxu0 0.0
    %803 = vmatpush2.msra.mxu0 0.0
    %804 = vmatprep.subr.mxu0 0.0
    %805 = vmatpush2.msra.mxu0 0.0
    %806 = vmatprep.subr.mxu0 0.0
    %807 = vmatpush2.msra.mxu0 0.0
    %808 = vmatprep.subr.mxu0 0.0
    %809 = vmatpush2.msra.mxu0 0.0
    %810 = vmatprep.subr.mxu0 0.0
    %811 = vmatpush2.msra.mxu0 0.0
    %812 = vmatprep.subr.mxu0 0.0
    %813 = vmatpush2.msra.mxu0 0.0
    %814 = vmatprep.subr.mxu0 0.0
    %815 = vmatpush2.msra.mxu0 0.0
    %816 = vmatprep.subr.mxu0 0.0
    %817 = vmatpush2.msra.mxu0 0.0
    %818 = vmatprep.subr.mxu0 0.0
    %819 = vmatpush2.msra.mxu0 0.0
    %820 = vmatprep.subr.mxu0 0.0
    %821 = vmatpush2.msra.mxu0 0.0
    %822 = vmatprep.subr.mxu0 0.0
    %823 = vmatpush2.msra.mxu0 0.0
    %824 = vmatprep.subr.mxu0 0.0
    %825 = vmatpush2.msra.mxu0 0.0
    %826 = vmatprep.subr.mxu0 0.0
    %827 = vmatpush2.msra.mxu0 0.0
    %828 = vmatprep.subr.mxu0 0.0
    %829 = vmatpush2.msra.mxu0 0.0
    %830 = vmatprep.mubr.f32.mxu0 0.0
    %831 = vmatmul.mubr.f32.gmra.mxu0 %v102
    %v832 = vpop.f32.mrf.mxu0
    %v833 = vadd.f32 %v91, %v832
    %v834 = vpop.f32.mrf.mxu0
    %v835 = vadd.f32 %v91, %v834
    %836 = vmatprep.mubr.f32.mxu0 0.0
    %837 = vmatmul.mubr.f32.gmra.mxu0 %v105
    %v838 = vpop.f32.mrf.mxu0
    %v839 = vadd.f32 %v96, %v838
    %v840 = vpop.f32.mrf.mxu0
    %v841 = vadd.f32 %v96, %v840
    %842 = vdwg.mxu0
    %v843 = vmax.f32 %v833, 0.0
    %v844 = vmax.f32 %v835, 0.0
    %v845 = vmax.f32 %v839, 0.0
    %v846 = vmax.f32 %v841, 0.0
    %847 = vrot.lane.b32.xlu0 %v843, 17
    %v848 = vpop.permute.xlu0 %847
    %849 = vrot.lane.b32.xlu0 %v845, 17
    %v850 = vpop.permute.xlu0 %849
    %851 = vrot.lane.b32.xlu0 %v844, 17
    %v852 = vpop.permute.xlu0 %851
    %853 = vrot.lane.b32.xlu0 %v846, 17
    %v854 = vpop.permute.xlu0 %853
    %v855 = vsel %vm203, %v848, %v852
    %v856 = vsel %vm203, %v850, %v854
    %v857 = vsel %vm203, %v852, %v848
    %v858 = vsel %vm203, %v854, %v850
    %v859 = vmul.f32 %v857, %v212
    %v860 = vmul.f32 %v855, %v216
    %v861 = vmul.f32 %v858, %v212
    %v862 = vmul.f32 %v856, %v216
    %v863 = vmul.f32 %v859, %v226
    %v864 = vmul.f32 %v860, %v226
    %v865 = vmul.f32 %v861, %v231
    %v866 = vmul.f32 %v862, %v231
    %v867 = vadd.f32 %v863, %v240
    %v868 = vadd.f32 %v864, %v240
    %v869 = vadd.f32 %v865, %v245
    %v870 = vadd.f32 %v866, %v245
    %871 = vrot.lane.b32.xlu0 %v843, 16
    %v872 = vpop.permute.xlu0 %871
    %873 = vrot.lane.b32.xlu0 %v845, 16
    %v874 = vpop.permute.xlu0 %873
    %875 = vrot.lane.b32.xlu0 %v844, 16
    %v876 = vpop.permute.xlu0 %875
    %877 = vrot.lane.b32.xlu0 %v846, 16
    %v878 = vpop.permute.xlu0 %877
    %v879 = vsel %vm259, %v872, %v876
    %v880 = vsel %vm259, %v874, %v878
    %v881 = vsel %vm259, %v876, %v872
    %v882 = vsel %vm259, %v878, %v874
    %v883 = vmul.f32 %v881, %v268
    %v884 = vmul.f32 %v879, %v272
    %v885 = vmul.f32 %v882, %v268
    %v886 = vmul.f32 %v880, %v272
    %v887 = vmul.f32 %v883, %v282
    %v888 = vmul.f32 %v884, %v282
    %v889 = vmul.f32 %v885, %v287
    %v890 = vmul.f32 %v886, %v287
    %v891 = vadd.f32 %v867, %v887
    %v892 = vadd.f32 %v868, %v888
    %v893 = vadd.f32 %v869, %v889
    %v894 = vadd.f32 %v870, %v890
    %895 = vrot.lane.b32.xlu0 %v843, 15
    %v896 = vpop.permute.xlu0 %895
    %897 = vrot.lane.b32.xlu0 %v845, 15
    %v898 = vpop.permute.xlu0 %897
    %899 = vrot.lane.b32.xlu0 %v844, 15
    %v900 = vpop.permute.xlu0 %899
    %901 = vrot.lane.b32.xlu0 %v846, 15
    %v902 = vpop.permute.xlu0 %901
    %v903 = vsel %vm305, %v896, %v900
    %v904 = vsel %vm305, %v898, %v902
    %v905 = vsel %vm305, %v900, %v896
    %v906 = vsel %vm305, %v902, %v898
    %v907 = vmul.f32 %v905, %v314
    %v908 = vmul.f32 %v903, %v318
    %v909 = vmul.f32 %v906, %v314
    %v910 = vmul.f32 %v904, %v318
    %v911 = vmul.f32 %v907, %v328
    %v912 = vmul.f32 %v908, %v328
    %v913 = vmul.f32 %v909, %v333
    %v914 = vmul.f32 %v910, %v333
    %v915 = vadd.f32 %v891, %v911
    %v916 = vadd.f32 %v892, %v912
    %v917 = vadd.f32 %v893, %v913
    %v918 = vadd.f32 %v894, %v914
    %919 = vrot.lane.b32.xlu0 %v843, 1
    %v920 = vpop.permute.xlu0 %919
    %921 = vrot.lane.b32.xlu0 %v845, 1
    %v922 = vpop.permute.xlu0 %921
    %923 = vrot.lane.b32.xlu0 %v844, 1
    %v924 = vpop.permute.xlu0 %923
    %925 = vrot.lane.b32.xlu0 %v846, 1
    %v926 = vpop.permute.xlu0 %925
    %v927 = vsel %vm351, %v920, %v924
    %v928 = vsel %vm351, %v922, %v926
    %v929 = vsel %vm351, %v924, %v920
    %v930 = vsel %vm351, %v926, %v922
    %v931 = vmul.f32 %v929, %v360
    %v932 = vmul.f32 %v927, %v364
    %v933 = vmul.f32 %v930, %v360
    %v934 = vmul.f32 %v928, %v364
    %v935 = vmul.f32 %v931, %v374
    %v936 = vmul.f32 %v932, %v374
    %v937 = vmul.f32 %v933, %v379
    %v938 = vmul.f32 %v934, %v379
    %v939 = vadd.f32 %v915, %v935
    %v940 = vadd.f32 %v916, %v936
    %v941 = vadd.f32 %v917, %v937
    %v942 = vadd.f32 %v918, %v938
    %v943 = vmul.f32 %v843, %v392
    %v944 = vmul.f32 %v844, %v392
    %v945 = vmul.f32 %v845, %v397
    %v946 = vmul.f32 %v846, %v397
    %v947 = vadd.f32 %v939, %v943
    %v948 = vadd.f32 %v940, %v944
    %v949 = vadd.f32 %v941, %v945
    %v950 = vadd.f32 %v942, %v946
    %951 = vrot.lane.b32.xlu0 %v843, 127
    %v952 = vpop.permute.xlu0 %951
    %953 = vrot.lane.b32.xlu0 %v845, 127
    %v954 = vpop.permute.xlu0 %953
    %955 = vrot.lane.b32.xlu0 %v844, 127
    %v956 = vpop.permute.xlu0 %955
    %957 = vrot.lane.b32.xlu0 %v846, 127
    %v958 = vpop.permute.xlu0 %957
    %v959 = vsel %vm415, %v952, %v956
    %v960 = vsel %vm415, %v954, %v958
    %v961 = vsel %vm415, %v956, %v952
    %v962 = vsel %vm415, %v958, %v954
    %v963 = vmul.f32 %v959, %v424
    %v964 = vmul.f32 %v961, %v428
    %v965 = vmul.f32 %v960, %v424
    %v966 = vmul.f32 %v962, %v428
    %v967 = vmul.f32 %v963, %v438
    %v968 = vmul.f32 %v964, %v438
    %v969 = vmul.f32 %v965, %v443
    %v970 = vmul.f32 %v966, %v443
    %v971 = vadd.f32 %v947, %v967
    %v972 = vadd.f32 %v948, %v968
    %v973 = vadd.f32 %v949, %v969
    %v974 = vadd.f32 %v950, %v970
    %975 = vrot.lane.b32.xlu0 %v843, 113
    %v976 = vpop.permute.xlu0 %975
    %977 = vrot.lane.b32.xlu0 %v845, 113
    %v978 = vpop.permute.xlu0 %977
    %979 = vrot.lane.b32.xlu0 %v844, 113
    %v980 = vpop.permute.xlu0 %979
    %981 = vrot.lane.b32.xlu0 %v846, 113
    %v982 = vpop.permute.xlu0 %981
    %v983 = vsel %vm461, %v976, %v980
    %v984 = vsel %vm461, %v978, %v982
    %v985 = vsel %vm461, %v980, %v976
    %v986 = vsel %vm461, %v982, %v978
    %v987 = vmul.f32 %v983, %v470
    %v988 = vmul.f32 %v985, %v474
    %v989 = vmul.f32 %v984, %v470
    %v990 = vmul.f32 %v986, %v474
    %v991 = vmul.f32 %v987, %v484
    %v992 = vmul.f32 %v988, %v484
    %v993 = vmul.f32 %v989, %v489
    %v994 = vmul.f32 %v990, %v489
    %v995 = vadd.f32 %v971, %v991
    %v996 = vadd.f32 %v972, %v992
    %v997 = vadd.f32 %v973, %v993
    %v998 = vadd.f32 %v974, %v994
    %999 = vrot.lane.b32.xlu0 %v843, 112
    %v1000 = vpop.permute.xlu0 %999
    %1001 = vrot.lane.b32.xlu0 %v845, 112
    %v1002 = vpop.permute.xlu0 %1001
    %1003 = vrot.lane.b32.xlu0 %v844, 112
    %v1004 = vpop.permute.xlu0 %1003
    %1005 = vrot.lane.b32.xlu0 %v846, 112
    %v1006 = vpop.permute.xlu0 %1005
    %v1007 = vsel %vm507, %v1000, %v1004
    %v1008 = vsel %vm507, %v1002, %v1006
    %v1009 = vsel %vm507, %v1004, %v1000
    %v1010 = vsel %vm507, %v1006, %v1002
    %v1011 = vmul.f32 %v1007, %v516
    %v1012 = vmul.f32 %v1009, %v520
    %v1013 = vmul.f32 %v1008, %v516
    %v1014 = vmul.f32 %v1010, %v520
    %v1015 = vmul.f32 %v1011, %v530
    %v1016 = vmul.f32 %v1012, %v530
    %v1017 = vmul.f32 %v1013, %v535
    %v1018 = vmul.f32 %v1014, %v535
    %v1019 = vadd.f32 %v995, %v1015
    %v1020 = vadd.f32 %v996, %v1016
    %v1021 = vadd.f32 %v997, %v1017
    %v1022 = vadd.f32 %v998, %v1018
    %1023 = vrot.lane.b32.xlu0 %v843, 111
    %v1024 = vpop.permute.xlu0 %1023
    %1025 = vrot.lane.b32.xlu0 %v845, 111
    %v1026 = vpop.permute.xlu0 %1025
    %1027 = vrot.lane.b32.xlu0 %v844, 111
    %v1028 = vpop.permute.xlu0 %1027
    %1029 = vrot.lane.b32.xlu0 %v846, 111
    %v1030 = vpop.permute.xlu0 %1029
    %v1031 = vsel %vm553, %v1024, %v1028
    %v1032 = vsel %vm553, %v1026, %v1030
    %v1033 = vsel %vm553, %v1028, %v1024
    %v1034 = vsel %vm553, %v1030, %v1026
    %v1035 = vmul.f32 %v1031, %v562
    %v1036 = vmul.f32 %v1033, %v566
    %v1037 = vmul.f32 %v1032, %v562
    %v1038 = vmul.f32 %v1034, %v566
    %v1039 = vmul.f32 %v1035, %v576
    %v1040 = vmul.f32 %v1036, %v576
    %v1041 = vmul.f32 %v1037, %v581
    %v1042 = vmul.f32 %v1038, %v581
    %v1043 = vadd.f32 %v1019, %v1039
    %v1044 = vadd.f32 %v1020, %v1040
    %v1045 = vadd.f32 %v1021, %v1041
    %v1046 = vadd.f32 %v1022, %v1042
    %v1047 = vmax.f32 %v1043, 0.0
    %v1048 = vmax.f32 %v1044, 0.0
    %v1049 = vmax.f32 %v1045, 0.0
    %v1050 = vmax.f32 %v1046, 0.0
    %1051 = vmatprep.subr.mxu0 0.0
    %1052 = vmatpush1.msra.mxu0 0.0
    %1053 = vmatprep.subr.mxu0 0.0
    %1054 = vmatpush1.msra.mxu0 0.0
    %1055 = vmatprep.subr.mxu0 0.0
    %1056 = vmatpush1.msra.mxu0 0.0
    %1057 = vmatprep.subr.mxu0 0.0
    %1058 = vmatpush1.msra.mxu0 0.0
    %1059 = vmatprep.subr.mxu0 0.0
    %1060 = vmatpush1.msra.mxu0 0.0
    %1061 = vmatprep.subr.mxu0 0.0
    %1062 = vmatpush1.msra.mxu0 0.0
    %1063 = vmatprep.subr.mxu0 0.0
    %1064 = vmatpush1.msra.mxu0 0.0
    %1065 = vmatprep.subr.mxu0 0.0
    %1066 = vmatpush1.msra.mxu0 0.0
    %1067 = vmatprep.subr.mxu0 0.0
    %1068 = vmatpush1.msra.mxu0 0.0
    %1069 = vmatprep.subr.mxu0 0.0
    %1070 = vmatpush1.msra.mxu0 0.0
    %1071 = vmatprep.subr.mxu0 0.0
    %1072 = vmatpush1.msra.mxu0 0.0
    %1073 = vmatprep.subr.mxu0 0.0
    %1074 = vmatpush1.msra.mxu0 0.0
    %1075 = vmatprep.subr.mxu0 0.0
    %1076 = vmatpush1.msra.mxu0 0.0
    %1077 = vmatprep.subr.mxu0 0.0
    %1078 = vmatpush1.msra.mxu0 0.0
    %1079 = vmatprep.subr.mxu0 %v1050
    %1080 = vmatpush1.msra.mxu0 %v1049
    %1081 = vmatprep.subr.mxu0 %v1048
    %1082 = vmatpush1.msra.mxu0 %v1047
    %1083 = vmatprep.subr.mxu0 0.0
    %1084 = vmatpush2.msra.mxu0 0.0
    %1085 = vmatprep.subr.mxu0 0.0
    %1086 = vmatpush2.msra.mxu0 0.0
    %1087 = vmatprep.subr.mxu0 0.0
    %1088 = vmatpush2.msra.mxu0 0.0
    %1089 = vmatprep.subr.mxu0 0.0
    %1090 = vmatpush2.msra.mxu0 0.0
    %1091 = vmatprep.subr.mxu0 0.0
    %1092 = vmatpush2.msra.mxu0 0.0
    %1093 = vmatprep.subr.mxu0 0.0
    %1094 = vmatpush2.msra.mxu0 0.0
    %1095 = vmatprep.subr.mxu0 0.0
    %1096 = vmatpush2.msra.mxu0 0.0
    %1097 = vmatprep.subr.mxu0 0.0
    %1098 = vmatpush2.msra.mxu0 0.0
    %1099 = vmatprep.subr.mxu0 0.0
    %1100 = vmatpush2.msra.mxu0 0.0
    %1101 = vmatprep.subr.mxu0 0.0
    %1102 = vmatpush2.msra.mxu0 0.0
    %1103 = vmatprep.subr.mxu0 0.0
    %1104 = vmatpush2.msra.mxu0 0.0
    %1105 = vmatprep.subr.mxu0 0.0
    %1106 = vmatpush2.msra.mxu0 0.0
    %1107 = vmatprep.subr.mxu0 0.0
    %1108 = vmatpush2.msra.mxu0 0.0
    %1109 = vmatprep.subr.mxu0 0.0
    %1110 = vmatpush2.msra.mxu0 0.0
    %1111 = vmatprep.subr.mxu0 0.0
    %1112 = vmatpush2.msra.mxu0 0.0
    %1113 = vmatprep.subr.mxu0 0.0
    %1114 = vmatpush2.msra.mxu0 0.0
    %1115 = vmatprep.mubr.f32.mxu0 0.0
    %1116 = vmatmul.mubr.f32.gmra.mxu0 %v602
    %v1117 = vpop.f32.mrf.mxu0
    %v1118 = vadd.f32 %v598, %v1117
    %v1119 = vpop.f32.mrf.mxu0
    %v1120 = vadd.f32 %v598, %v1119
    %1121 = vdwg.mxu0
    %1122 = vmatprep.subr.mxu0 0.0
    %1123 = vmatpush1.msra.mxu0 0.0
    %1124 = vmatprep.subr.mxu0 0.0
    %1125 = vmatpush1.msra.mxu0 0.0
    %1126 = vmatprep.subr.mxu0 0.0
    %1127 = vmatpush1.msra.mxu0 0.0
    %1128 = vmatprep.subr.mxu0 0.0
    %1129 = vmatpush1.msra.mxu0 0.0
    %1130 = vmatprep.subr.mxu0 0.0
    %1131 = vmatpush1.msra.mxu0 0.0
    %1132 = vmatprep.subr.mxu0 0.0
    %1133 = vmatpush1.msra.mxu0 0.0
    %1134 = vmatprep.subr.mxu0 0.0
    %1135 = vmatpush1.msra.mxu0 0.0
    %1136 = vmatprep.subr.mxu0 0.0
    %1137 = vmatpush1.msra.mxu0 0.0
    %1138 = vmatprep.subr.mxu0 0.0
    %1139 = vmatpush1.msra.mxu0 0.0
    %1140 = vmatprep.subr.mxu0 0.0
    %1141 = vmatpush1.msra.mxu0 0.0
    %1142 = vmatprep.subr.mxu0 0.0
    %1143 = vmatpush1.msra.mxu0 0.0
    %1144 = vmatprep.subr.mxu0 0.0
    %1145 = vmatpush1.msra.mxu0 0.0
    %1146 = vmatprep.subr.mxu0 0.0
    %1147 = vmatpush1.msra.mxu0 0.0
    %1148 = vmatprep.subr.mxu0 0.0
    %1149 = vmatpush1.msra.mxu0 0.0
    %1150 = vmatprep.subr.mxu0 0.0
    %1151 = vmatpush1.msra.mxu0 0.0
    %1152 = vmatprep.subr.mxu0 %v764
    %1153 = vmatpush1.msra.mxu0 %v762
    %1154 = vmatprep.subr.mxu0 0.0
    %1155 = vmatpush2.msra.mxu0 0.0
    %1156 = vmatprep.subr.mxu0 0.0
    %1157 = vmatpush2.msra.mxu0 0.0
    %1158 = vmatprep.subr.mxu0 0.0
    %1159 = vmatpush2.msra.mxu0 0.0
    %1160 = vmatprep.subr.mxu0 0.0
    %1161 = vmatpush2.msra.mxu0 0.0
    %1162 = vmatprep.subr.mxu0 0.0
    %1163 = vmatpush2.msra.mxu0 0.0
    %1164 = vmatprep.subr.mxu0 0.0
    %1165 = vmatpush2.msra.mxu0 0.0
    %1166 = vmatprep.subr.mxu0 0.0
    %1167 = vmatpush2.msra.mxu0 0.0
    %1168 = vmatprep.subr.mxu0 0.0
    %1169 = vmatpush2.msra.mxu0 0.0
    %1170 = vmatprep.subr.mxu0 0.0
    %1171 = vmatpush2.msra.mxu0 0.0
    %1172 = vmatprep.subr.mxu0 0.0
    %1173 = vmatpush2.msra.mxu0 0.0
    %1174 = vmatprep.subr.mxu0 0.0
    %1175 = vmatpush2.msra.mxu0 0.0
    %1176 = vmatprep.subr.mxu0 0.0
    %1177 = vmatpush2.msra.mxu0 0.0
    %1178 = vmatprep.subr.mxu0 0.0
    %1179 = vmatpush2.msra.mxu0 0.0
    %1180 = vmatprep.subr.mxu0 0.0
    %1181 = vmatpush2.msra.mxu0 0.0
    %1182 = vmatprep.subr.mxu0 0.0
    %1183 = vmatpush2.msra.mxu0 0.0
    %1184 = vmatprep.subr.mxu0 0.0
    %1185 = vmatpush2.msra.mxu0 0.0
    %1186 = vmatprep.mubr.f32.mxu0 0.0
    %1187 = vmatmul.mubr.f32.gmra.mxu0 %v681
    %v1188 = vpop.f32.mrf.mxu0
    %v1189 = vadd.f32 %v678, %v1188
    %v1190 = vpop.f32.mrf.mxu0
    %v1191 = vadd.f32 %v678, %v1190
    %1192 = vdwg.mxu0
    %v1193 = vadd.f32 %v1118, %v1189
    %v1194 = vadd.f32 %v1120, %v1191
    %s1195 = scalar_lea.vmem [#allocation2], 16
    %1196 = vst [vmem:[%s1195] sm:$0xff] %v1193
    %1197 = vst [vmem:[%s1195 + $0x8] sm:$0xff] %v1194
    // Predicated region
    $region42: #{tpu_custom_call.1} parent=1 // pred_check
      _
    $region43: #{tpu_custom_call.1} parent=1 // pred_check_branch
      %1199 = sbr.rel (0) target = $region45
    $region44: #{tpu_custom_call.1} parent=1 // pred_region
      %s1201 = ssub.s32 512, 512
      %1202 = vsyncadd [#allocation3], %s1201
      %s1203 = sshll.u32 [#allocation2], 4
      %s1204 = int_to_ptr.vmem [resolvable:$true] %s1203
      %1209 = dma.vmem_to_hbm [thread:$0]  %s1204, 512, %s10, [#allocation3], 256, 256, 16
    $region45: #{tpu_custom_call.1} parent=1 // pred_fallthru
      _
    // Predicated region
    $region46: #{tpu_custom_call.1} parent=1 // pred_check
      _
    $region47: #{tpu_custom_call.1} parent=1 // pred_check_branch
      %1211 = sbr.rel (0) target = $region49
    $region48: #{tpu_custom_call.1} parent=1 // pred_region
      %1212 = dma.done [#allocation3], 512
    $region49: #{tpu_custom_call.1} parent=1 // pred_fallthru
      _
    %1213 = vsyncpa [#allocation3], 1

</llo_original>
